<compile_context>
chip_gen: v7x
topology: tpu7x:2x2x1
jax: 0.10.0
libtpu: 0.0.40
codegen_flags: <defaults>
</compile_context>

<pallas_src>
import functools

import jax
import jax.numpy as jnp
from jax.experimental import pallas as pl
from jax.experimental.pallas import tpu as pltpu

EPS = 1e-5  # nn.LayerNorm default


def _prenorm_cross_attn_kernel(x_ref, gx_ref, bx_ref,
                               c_ref, gc_ref, bc_ref,
                               mask_ref,
                               wq_ref, wkv_ref, wo_ref, bo_ref,
                               o_ref,
                               *, heads, dim_head, scale):
    f32 = jnp.float32
    x = x_ref[0].astype(f32)          # (TN, Dq)
    c = c_ref[0].astype(f32)          # (M,  Dc)

    def layer_norm(v, gamma, beta):
        mu = jnp.mean(v, axis=-1, keepdims=True)
        var = jnp.mean((v - mu) * (v - mu), axis=-1, keepdims=True)  # biased, like torch
        return (v - mu) * jax.lax.rsqrt(var + EPS) * gamma + beta

    xn = layer_norm(x, gx_ref[...].astype(f32), bx_ref[...].astype(f32))
    cn = layer_norm(c, gc_ref[...].astype(f32), bc_ref[...].astype(f32))

    # bf16 operands, f32 accumulation -> MXU native path.
    xn_b = xn.astype(jnp.bfloat16)
    cn_b = cn.astype(jnp.bfloat16)

    q = jnp.dot(xn_b, wq_ref[...], preferred_element_type=f32)      # (TN, H*Dh)
    kv = jnp.dot(cn_b, wkv_ref[...], preferred_element_type=f32)    # (M, 2*H*Dh)

    inner = heads * dim_head
    k = kv[:, :inner]
    v = kv[:, inner:]

    valid = mask_ref[0] != 0              # (1, M) bool, broadcasts over query rows
    neg = -jnp.finfo(f32).max             # torch: -finfo(sim.dtype).max

    head_outs = []
    for h in range(heads):                # static unroll; cross_heads is small
        sl = slice(h * dim_head, (h + 1) * dim_head)
        q_h = q[:, sl].astype(jnp.bfloat16)      # (TN, Dh)
        k_h = k[:, sl].astype(jnp.bfloat16)      # (M,  Dh)
        v_h = v[:, sl].astype(jnp.bfloat16)      # (M,  Dh)

        # q_h @ k_h.T -> (TN, M), f32 accumulation.
        sim = jax.lax.dot_general(q_h, k_h, (((1,), (1,)), ((), ())),
                                  preferred_element_type=f32) * scale
        sim = jnp.where(valid, sim, neg)

        sim = sim - jnp.max(sim, axis=-1, keepdims=True)
        p = jnp.exp(sim)
        attn = p / jnp.sum(p, axis=-1, keepdims=True)
        # TODO(synk): attention-weight dropout omitted (inference / eval mode).

        head_outs.append(
            jnp.dot(attn.astype(jnp.bfloat16), v_h, preferred_element_type=f32))

    o = jnp.concatenate(head_outs, axis=-1) if heads > 1 else head_outs[0]  # (TN, H*Dh)
    out = jnp.dot(o.astype(jnp.bfloat16), wo_ref[...], preferred_element_type=f32)
    out = out + bo_ref[...].astype(f32)
    o_ref[0] = out.astype(o_ref.dtype)


@functools.partial(jax.jit, static_argnames=("heads", "dim_head", "q_tile"))
def prenorm_cross_attention(x, gamma_x, beta_x,
                            context, gamma_c, beta_c, mask,
                            w_q, w_kv, w_o, b_o,
                            *, heads, dim_head, q_tile=256):
    B, N, Dq = x.shape
    _, M, Dc = context.shape
    inner = heads * dim_head
    assert w_q.shape == (Dq, inner)
    assert w_kv.shape == (Dc, 2 * inner)
    assert w_o.shape == (inner, Dq)
    assert mask.shape == (B, M)

    # Row tile over the query/latent axis (multiple of 8; full N if it doesn't divide).
    tn = q_tile if (N % q_tile == 0) else N
    assert N % tn == 0

    gx = gamma_x.reshape(1, Dq).astype(jnp.float32)
    bx = beta_x.reshape(1, Dq).astype(jnp.float32)
    gc = gamma_c.reshape(1, Dc).astype(jnp.float32)
    bc = beta_c.reshape(1, Dc).astype(jnp.float32)
    bo = b_o.reshape(1, Dq).astype(jnp.float32)
    mask_i = mask.astype(jnp.int32).reshape(B, 1, M)

    # bf16 weights: halves weight DMA/VMEM footprint and matches MXU operand dtype.
    wq_b = w_q.astype(jnp.bfloat16)
    wkv_b = w_kv.astype(jnp.bfloat16)
    wo_b = w_o.astype(jnp.bfloat16)

    kernel = functools.partial(_prenorm_cross_attn_kernel,
                               heads=heads, dim_head=dim_head,
                               scale=float(dim_head) ** -0.5)

    grid = (B, N // tn)
    return pl.pallas_call(
        kernel,
        out_shape=jax.ShapeDtypeStruct((B, N, Dq), x.dtype),
        grid_spec=pltpu.PrefetchScalarGridSpec(
            num_scalar_prefetch=0,
            grid=grid,
            in_specs=[
                pl.BlockSpec((1, tn, Dq), lambda b, i: (b, i, 0)),      # x (latents)
                pl.BlockSpec((1, Dq),     lambda b, i: (0, 0)),         # gamma_x
                pl.BlockSpec((1, Dq),     lambda b, i: (0, 0)),         # beta_x
                pl.BlockSpec((1, M, Dc),  lambda b, i: (b, 0, 0)),      # context
                pl.BlockSpec((1, Dc),     lambda b, i: (0, 0)),         # gamma_c
                pl.BlockSpec((1, Dc),     lambda b, i: (0, 0)),         # beta_c
                pl.BlockSpec((1, 1, M),   lambda b, i: (b, 0, 0)),      # key mask
                pl.BlockSpec((Dq, inner),     lambda b, i: (0, 0)),     # Wq
                pl.BlockSpec((Dc, 2 * inner), lambda b, i: (0, 0)),     # Wkv (fused)
                pl.BlockSpec((inner, Dq),     lambda b, i: (0, 0)),     # Wo
                pl.BlockSpec((1, Dq),         lambda b, i: (0, 0)),     # bo
            ],
            out_specs=pl.BlockSpec((1, tn, Dq), lambda b, i: (b, i, 0)),
        ),
        compiler_params=pltpu.CompilerParams(
            # both axes independent -> shardable across TensorCores (v7x / megacore)
            dimension_semantics=("parallel", "parallel")),
    )(x, gx, bx, context, gc, bc, mask_i, wq_b, wkv_b, wo_b, bo)


def _reference(x, gamma_x, beta_x, context, gamma_c, beta_c, mask,
               w_q, w_kv, w_o, b_o, *, heads, dim_head):
    hp = jax.lax.Precision.HIGHEST

    def ln(v, g, b):
        v = v.astype(jnp.float32)
        mu = jnp.mean(v, axis=-1, keepdims=True)
        var = jnp.mean((v - mu) ** 2, axis=-1, keepdims=True)
        return (v - mu) / jnp.sqrt(var + EPS) * g + b

    xn = ln(x, gamma_x, beta_x)
    cn = ln(context, gamma_c, beta_c)
    B, N, _ = x.shape
    M = context.shape[1]
    inner = heads * dim_head

    q = jnp.einsum('bnd,de->bne', xn, w_q, precision=hp)
    kv = jnp.einsum('bmd,de->bme', cn, w_kv, precision=hp)
    k, v = kv[..., :inner], kv[..., inner:]

    q = q.reshape(B, N, heads, dim_head).transpose(0, 2, 1, 3)
    k = k.reshape(B, M, heads, dim_head).transpose(0, 2, 1, 3)
    v = v.reshape(B, M, heads, dim_head).transpose(0, 2, 1, 3)

    sim = jnp.einsum('bhnd,bhmd->bhnm', q, k, precision=hp) * (dim_head ** -0.5)
    neg = -jnp.finfo(jnp.float32).max
    sim = jnp.where(mask[:, None, None, :], sim, neg)
    attn = jax.nn.softmax(sim, axis=-1)
    o = jnp.einsum('bhnm,bhmd->bhnd', attn, v, precision=hp)
    o = o.transpose(0, 2, 1, 3).reshape(B, N, inner)
    return jnp.einsum('bne,ed->bnd', o, w_o, precision=hp) + b_o


if __name__ == "__main__":
    # Small shapes consistent with the Perceiver cross-attention block:
    # B=2 batch, N=16 latents, latent_dim=128 (lane-dense output), context len M=24,
    # context dim=64, cross_heads=2, cross_dim_head=64.
    B, N, Dq = 2, 16, 128
    M, Dc = 24, 64
    H, Dh = 2, 64
    inner = H * Dh

    key = jax.random.PRNGKey(0)
    keys = jax.random.split(key, 10)

    x = jax.random.normal(keys[0], (B, N, Dq), dtype=jnp.float32)
    context = jax.random.normal(keys[1], (B, M, Dc), dtype=jnp.float32)

    # LayerNorm affine params (perturbed so the affine path is exercised).
    gamma_x = 1.0 + 0.1 * jax.random.normal(keys[2], (Dq,), dtype=jnp.float32)
    beta_x = 0.1 * jax.random.normal(keys[3], (Dq,), dtype=jnp.float32)
    gamma_c = 1.0 + 0.1 * jax.random.normal(keys[4], (Dc,), dtype=jnp.float32)
    beta_c = 0.1 * jax.random.normal(keys[5], (Dc,), dtype=jnp.float32)

    # Attention weights (to_q / to_kv bias-free, to_out with bias), deterministic.
    w_q = jax.random.normal(keys[6], (Dq, inner), dtype=jnp.float32) / jnp.sqrt(Dq * 1.0)
    w_kv = jax.random.normal(keys[7], (Dc, 2 * inner), dtype=jnp.float32) / jnp.sqrt(Dc * 1.0)
    w_o = jax.random.normal(keys[8], (inner, Dq), dtype=jnp.float32) / jnp.sqrt(inner * 1.0)
    b_o = 0.02 * jnp.arange(Dq, dtype=jnp.float32)

    # key-padding mask, like `mask = x_dna != 0` in DNAPerceiver.forward
    mask = jax.random.uniform(keys[9], (B, M)) > 0.25

    out = prenorm_cross_attention(x, gamma_x, beta_x, context, gamma_c, beta_c,
                                  mask, w_q, w_kv, w_o, b_o,
                                  heads=H, dim_head=Dh)
    out = jax.block_until_ready(out)

    ref = _reference(x, gamma_x, beta_x, context, gamma_c, beta_c, mask,
                     w_q, w_kv, w_o, b_o, heads=H, dim_head=Dh)

    assert out.shape == (B, N, Dq)
    # Tolerance covers bf16 matmul operands (f32 accumulation) vs f32 reference.
    assert jnp.allclose(out, ref, atol=5e-2, rtol=5e-2), (
        "mismatch vs reference: max abs err = %g"
        % float(jnp.max(jnp.abs(out - ref))))

    print("KERNEL_OK")
</pallas_src>

<mosaic_0001>
module attributes {stable_mosaic.version = 11 : i64} {
  func.func @_prenorm_cross_attn_kernel(%arg0: i32, %arg1: i32, %arg2: memref<1x16x128xf32, #tpu.memory_space<vmem>>, %arg3: memref<1x128xf32, #tpu.memory_space<vmem>>, %arg4: memref<1x128xf32, #tpu.memory_space<vmem>>, %arg5: memref<1x24x64xf32, #tpu.memory_space<vmem>>, %arg6: memref<1x64xf32, #tpu.memory_space<vmem>>, %arg7: memref<1x64xf32, #tpu.memory_space<vmem>>, %arg8: memref<1x1x24xi32, #tpu.memory_space<vmem>>, %arg9: memref<128x128xbf16, #tpu.memory_space<vmem>>, %arg10: memref<64x256xbf16, #tpu.memory_space<vmem>>, %arg11: memref<128x128xbf16, #tpu.memory_space<vmem>>, %arg12: memref<1x128xf32, #tpu.memory_space<vmem>>, %arg13: memref<1x16x128xf32, #tpu.memory_space<vmem>>) attributes {dimension_semantics = [#tpu.dimension_semantics<parallel>, #tpu.dimension_semantics<parallel>], iteration_bounds = array<i64: 2, 1>, scalar_prefetch = 0 : i64, scratch_operands = 0 : i64, tpu.core_type = #tpu.core_type<tc>, window_params = [{transform_indices = @transform_0, window_bounds = array<i64: 1, 16, 128>}, {pipeline_mode = #tpu.pipeline_mode<synchronous>, transform_indices = @transform_1, window_bounds = array<i64: 1, 128>}, {pipeline_mode = #tpu.pipeline_mode<synchronous>, transform_indices = @transform_2, window_bounds = array<i64: 1, 128>}, {transform_indices = @transform_3, window_bounds = array<i64: 1, 24, 64>}, {pipeline_mode = #tpu.pipeline_mode<synchronous>, transform_indices = @transform_4, window_bounds = array<i64: 1, 64>}, {pipeline_mode = #tpu.pipeline_mode<synchronous>, transform_indices = @transform_5, window_bounds = array<i64: 1, 64>}, {transform_indices = @transform_6, window_bounds = array<i64: 1, 1, 24>}, {pipeline_mode = #tpu.pipeline_mode<synchronous>, transform_indices = @transform_7, window_bounds = array<i64: 128, 128>}, {pipeline_mode = #tpu.pipeline_mode<synchronous>, transform_indices = @transform_8, window_bounds = array<i64: 64, 256>}, {pipeline_mode = #tpu.pipeline_mode<synchronous>, transform_indices = @transform_9, window_bounds = array<i64: 128, 128>}, {pipeline_mode = #tpu.pipeline_mode<synchronous>, transform_indices = @transform_10, window_bounds = array<i64: 1, 128>}, {transform_indices = @transform_11, window_bounds = array<i64: 1, 16, 128>}]} {
    %c0 = arith.constant 0 : index
    %c0_0 = arith.constant 0 : index
    %c0_1 = arith.constant 0 : index
    %0 = vector.load %arg2[%c0, %c0_0, %c0_1] : memref<1x16x128xf32, #tpu.memory_space<vmem>>, vector<1x16x128xf32>
    %1 = vector.shape_cast %0 : vector<1x16x128xf32> to vector<16x128xf32>
    %c0_2 = arith.constant 0 : index
    %c0_3 = arith.constant 0 : index
    %c0_4 = arith.constant 0 : index
    %2 = vector.load %arg5[%c0_2, %c0_3, %c0_4] : memref<1x24x64xf32, #tpu.memory_space<vmem>>, vector<1x24x64xf32>
    %3 = vector.shape_cast %2 : vector<1x24x64xf32> to vector<24x64xf32>
    %c0_5 = arith.constant 0 : index
    %c0_6 = arith.constant 0 : index
    %4 = vector.load %arg3[%c0_5, %c0_6] : memref<1x128xf32, #tpu.memory_space<vmem>>, vector<1x128xf32>
    %c0_7 = arith.constant 0 : index
    %c0_8 = arith.constant 0 : index
    %5 = vector.load %arg4[%c0_7, %c0_8] : memref<1x128xf32, #tpu.memory_space<vmem>>, vector<1x128xf32>
    %cst = arith.constant dense<0.000000e+00> : vector<16xf32>
    %6 = vector.multi_reduction <add>, %1, %cst [1] : vector<16x128xf32> to vector<16xf32>
    %7 = vector.shape_cast %6 : vector<16xf32> to vector<16x1xf32>
    %cst_9 = arith.constant 1.280000e+02 : f32
    %8 = vector.broadcast %cst_9 : f32 to vector<16x1xf32>
    %9 = arith.divf %7, %8 : vector<16x1xf32>
    %10 = vector.broadcast %9 : vector<16x1xf32> to vector<16x128xf32>
    %11 = arith.subf %1, %10 : vector<16x128xf32>
    %12 = vector.broadcast %9 : vector<16x1xf32> to vector<16x128xf32>
    %13 = arith.subf %1, %12 : vector<16x128xf32>
    %14 = arith.mulf %11, %13 : vector<16x128xf32>
    %cst_10 = arith.constant dense<0.000000e+00> : vector<16xf32>
    %15 = vector.multi_reduction <add>, %14, %cst_10 [1] : vector<16x128xf32> to vector<16xf32>
    %16 = vector.shape_cast %15 : vector<16xf32> to vector<16x1xf32>
    %cst_11 = arith.constant 1.280000e+02 : f32
    %17 = vector.broadcast %cst_11 : f32 to vector<16x1xf32>
    %18 = arith.divf %16, %17 : vector<16x1xf32>
    %19 = vector.broadcast %9 : vector<16x1xf32> to vector<16x128xf32>
    %20 = arith.subf %1, %19 : vector<16x128xf32>
    %cst_12 = arith.constant 9.99999974E-6 : f32
    %21 = vector.broadcast %cst_12 : f32 to vector<16x1xf32>
    %22 = arith.addf %18, %21 : vector<16x1xf32>
    %23 = math.rsqrt %22 : vector<16x1xf32>
    %24 = vector.broadcast %23 : vector<16x1xf32> to vector<16x128xf32>
    %25 = arith.mulf %20, %24 : vector<16x128xf32>
    %26 = vector.broadcast %4 : vector<1x128xf32> to vector<16x128xf32>
    %27 = arith.mulf %25, %26 : vector<16x128xf32>
    %28 = vector.broadcast %5 : vector<1x128xf32> to vector<16x128xf32>
    %29 = arith.addf %27, %28 : vector<16x128xf32>
    %c0_13 = arith.constant 0 : index
    %c0_14 = arith.constant 0 : index
    %30 = vector.load %arg6[%c0_13, %c0_14] : memref<1x64xf32, #tpu.memory_space<vmem>>, vector<1x64xf32>
    %c0_15 = arith.constant 0 : index
    %c0_16 = arith.constant 0 : index
    %31 = vector.load %arg7[%c0_15, %c0_16] : memref<1x64xf32, #tpu.memory_space<vmem>>, vector<1x64xf32>
    %cst_17 = arith.constant dense<0.000000e+00> : vector<24xf32>
    %32 = vector.multi_reduction <add>, %3, %cst_17 [1] : vector<24x64xf32> to vector<24xf32>
    %33 = vector.shape_cast %32 : vector<24xf32> to vector<24x1xf32>
    %cst_18 = arith.constant 6.400000e+01 : f32
    %34 = vector.broadcast %cst_18 : f32 to vector<24x1xf32>
    %35 = arith.divf %33, %34 : vector<24x1xf32>
    %36 = vector.broadcast %35 : vector<24x1xf32> to vector<24x64xf32>
    %37 = arith.subf %3, %36 : vector<24x64xf32>
    %38 = vector.broadcast %35 : vector<24x1xf32> to vector<24x64xf32>
    %39 = arith.subf %3, %38 : vector<24x64xf32>
    %40 = arith.mulf %37, %39 : vector<24x64xf32>
    %cst_19 = arith.constant dense<0.000000e+00> : vector<24xf32>
    %41 = vector.multi_reduction <add>, %40, %cst_19 [1] : vector<24x64xf32> to vector<24xf32>
    %42 = vector.shape_cast %41 : vector<24xf32> to vector<24x1xf32>
    %cst_20 = arith.constant 6.400000e+01 : f32
    %43 = vector.broadcast %cst_20 : f32 to vector<24x1xf32>
    %44 = arith.divf %42, %43 : vector<24x1xf32>
    %45 = vector.broadcast %35 : vector<24x1xf32> to vector<24x64xf32>
    %46 = arith.subf %3, %45 : vector<24x64xf32>
    %cst_21 = arith.constant 9.99999974E-6 : f32
    %47 = vector.broadcast %cst_21 : f32 to vector<24x1xf32>
    %48 = arith.addf %44, %47 : vector<24x1xf32>
    %49 = math.rsqrt %48 : vector<24x1xf32>
    %50 = vector.broadcast %49 : vector<24x1xf32> to vector<24x64xf32>
    %51 = arith.mulf %46, %50 : vector<24x64xf32>
    %52 = vector.broadcast %30 : vector<1x64xf32> to vector<24x64xf32>
    %53 = arith.mulf %51, %52 : vector<24x64xf32>
    %54 = vector.broadcast %31 : vector<1x64xf32> to vector<24x64xf32>
    %55 = arith.addf %53, %54 : vector<24x64xf32>
    %56 = arith.truncf %29 : vector<16x128xf32> to vector<16x128xbf16>
    %57 = arith.truncf %55 : vector<24x64xf32> to vector<24x64xbf16>
    %c0_22 = arith.constant 0 : index
    %c0_23 = arith.constant 0 : index
    %58 = vector.load %arg9[%c0_22, %c0_23] : memref<128x128xbf16, #tpu.memory_space<vmem>>, vector<128x128xbf16>
    %cst_24 = arith.constant dense<0.000000e+00> : vector<16x128xf32>
    %59 = tpu.matmul %56, %58, %cst_24 {dimension_numbers = #tpu.dot_dimension_numbers<[1], [0], [0], [1], [0, 0, 1, 1], [], []>} : vector<16x128xbf16>, vector<128x128xbf16>, vector<16x128xf32> -> vector<16x128xf32>
    %c0_25 = arith.constant 0 : index
    %c0_26 = arith.constant 0 : index
    %60 = vector.load %arg10[%c0_25, %c0_26] : memref<64x256xbf16, #tpu.memory_space<vmem>>, vector<64x256xbf16>
    %cst_27 = arith.constant dense<0.000000e+00> : vector<24x256xf32>
    %61 = tpu.matmul %57, %60, %cst_27 {dimension_numbers = #tpu.dot_dimension_numbers<[1], [0], [0], [1], [0, 0, 1, 1], [], []>} : vector<24x64xbf16>, vector<64x256xbf16>, vector<24x256xf32> -> vector<24x256xf32>
    %62 = vector.extract_strided_slice %61 {offsets = [0, 0], sizes = [24, 128], strides = [1, 1]} : vector<24x256xf32> to vector<24x128xf32>
    %63 = vector.extract_strided_slice %61 {offsets = [0, 128], sizes = [24, 128], strides = [1, 1]} : vector<24x256xf32> to vector<24x128xf32>
    %c0_28 = arith.constant 0 : index
    %c0_29 = arith.constant 0 : index
    %c0_30 = arith.constant 0 : index
    %64 = vector.load %arg8[%c0_28, %c0_29, %c0_30] : memref<1x1x24xi32, #tpu.memory_space<vmem>>, vector<1x1x24xi32>
    %65 = vector.shape_cast %64 : vector<1x1x24xi32> to vector<1x24xi32>
    %c0_i32 = arith.constant 0 : i32
    %66 = vector.broadcast %c0_i32 : i32 to vector<1x24xi32>
    %67 = arith.cmpi ne, %65, %66 : vector<1x24xi32>
    %68 = vector.extract_strided_slice %59 {offsets = [0, 0], sizes = [16, 64], strides = [1, 1]} : vector<16x128xf32> to vector<16x64xf32>
    %69 = arith.truncf %68 : vector<16x64xf32> to vector<16x64xbf16>
    %70 = vector.extract_strided_slice %62 {offsets = [0, 0], sizes = [24, 64], strides = [1, 1]} : vector<24x128xf32> to vector<24x64xf32>
    %71 = arith.truncf %70 : vector<24x64xf32> to vector<24x64xbf16>
    %72 = vector.extract_strided_slice %63 {offsets = [0, 0], sizes = [24, 64], strides = [1, 1]} : vector<24x128xf32> to vector<24x64xf32>
    %73 = arith.truncf %72 : vector<24x64xf32> to vector<24x64xbf16>
    %cst_31 = arith.constant dense<0.000000e+00> : vector<16x24xf32>
    %74 = tpu.matmul %69, %71, %cst_31 {dimension_numbers = #tpu.dot_dimension_numbers<[1], [1], [0], [0], [0, 0, 1, 0], [], []>} : vector<16x64xbf16>, vector<24x64xbf16>, vector<16x24xf32> -> vector<16x24xf32>
    %cst_32 = arith.constant 1.250000e-01 : f32
    %75 = vector.broadcast %cst_32 : f32 to vector<16x24xf32>
    %76 = arith.mulf %74, %75 : vector<16x24xf32>
    %cst_33 = arith.constant -3.40282347E+38 : f32
    %77 = vector.shape_cast %67 : vector<1x24xi1> to vector<1x24xi1>
    %78 = vector.broadcast %77 : vector<1x24xi1> to vector<16x24xi1>
    %79 = vector.broadcast %cst_33 : f32 to vector<16x24xf32>
    %80 = arith.select %78, %76, %79 : vector<16x24xi1>, vector<16x24xf32>
    %cst_34 = arith.constant dense<0xFF800000> : vector<16xf32>
    %81 = vector.multi_reduction <maximumf>, %80, %cst_34 [1] : vector<16x24xf32> to vector<16xf32>
    %82 = vector.shape_cast %81 : vector<16xf32> to vector<16x1xf32>
    %83 = vector.broadcast %82 : vector<16x1xf32> to vector<16x24xf32>
    %84 = arith.subf %80, %83 : vector<16x24xf32>
    %85 = math.exp %84 : vector<16x24xf32>
    %cst_35 = arith.constant dense<0.000000e+00> : vector<16xf32>
    %86 = vector.multi_reduction <add>, %85, %cst_35 [1] : vector<16x24xf32> to vector<16xf32>
    %87 = vector.shape_cast %86 : vector<16xf32> to vector<16x1xf32>
    %88 = vector.broadcast %87 : vector<16x1xf32> to vector<16x24xf32>
    %89 = arith.divf %85, %88 : vector<16x24xf32>
    %90 = arith.truncf %89 : vector<16x24xf32> to vector<16x24xbf16>
    %cst_36 = arith.constant dense<0.000000e+00> : vector<16x64xf32>
    %91 = tpu.matmul %90, %73, %cst_36 {dimension_numbers = #tpu.dot_dimension_numbers<[1], [0], [0], [1], [0, 0, 1, 1], [], []>} : vector<16x24xbf16>, vector<24x64xbf16>, vector<16x64xf32> -> vector<16x64xf32>
    %92 = vector.extract_strided_slice %59 {offsets = [0, 64], sizes = [16, 64], strides = [1, 1]} : vector<16x128xf32> to vector<16x64xf32>
    %93 = arith.truncf %92 : vector<16x64xf32> to vector<16x64xbf16>
    %94 = vector.extract_strided_slice %62 {offsets = [0, 64], sizes = [24, 64], strides = [1, 1]} : vector<24x128xf32> to vector<24x64xf32>
    %95 = arith.truncf %94 : vector<24x64xf32> to vector<24x64xbf16>
    %96 = vector.extract_strided_slice %63 {offsets = [0, 64], sizes = [24, 64], strides = [1, 1]} : vector<24x128xf32> to vector<24x64xf32>
    %97 = arith.truncf %96 : vector<24x64xf32> to vector<24x64xbf16>
    %cst_37 = arith.constant dense<0.000000e+00> : vector<16x24xf32>
    %98 = tpu.matmul %93, %95, %cst_37 {dimension_numbers = #tpu.dot_dimension_numbers<[1], [1], [0], [0], [0, 0, 1, 0], [], []>} : vector<16x64xbf16>, vector<24x64xbf16>, vector<16x24xf32> -> vector<16x24xf32>
    %cst_38 = arith.constant 1.250000e-01 : f32
    %99 = vector.broadcast %cst_38 : f32 to vector<16x24xf32>
    %100 = arith.mulf %98, %99 : vector<16x24xf32>
    %cst_39 = arith.constant -3.40282347E+38 : f32
    %101 = vector.shape_cast %67 : vector<1x24xi1> to vector<1x24xi1>
    %102 = vector.broadcast %101 : vector<1x24xi1> to vector<16x24xi1>
    %103 = vector.broadcast %cst_39 : f32 to vector<16x24xf32>
    %104 = arith.select %102, %100, %103 : vector<16x24xi1>, vector<16x24xf32>
    %cst_40 = arith.constant dense<0xFF800000> : vector<16xf32>
    %105 = vector.multi_reduction <maximumf>, %104, %cst_40 [1] : vector<16x24xf32> to vector<16xf32>
    %106 = vector.shape_cast %105 : vector<16xf32> to vector<16x1xf32>
    %107 = vector.broadcast %106 : vector<16x1xf32> to vector<16x24xf32>
    %108 = arith.subf %104, %107 : vector<16x24xf32>
    %109 = math.exp %108 : vector<16x24xf32>
    %cst_41 = arith.constant dense<0.000000e+00> : vector<16xf32>
    %110 = vector.multi_reduction <add>, %109, %cst_41 [1] : vector<16x24xf32> to vector<16xf32>
    %111 = vector.shape_cast %110 : vector<16xf32> to vector<16x1xf32>
    %112 = vector.broadcast %111 : vector<16x1xf32> to vector<16x24xf32>
    %113 = arith.divf %109, %112 : vector<16x24xf32>
    %114 = arith.truncf %113 : vector<16x24xf32> to vector<16x24xbf16>
    %cst_42 = arith.constant dense<0.000000e+00> : vector<16x64xf32>
    %115 = tpu.matmul %114, %97, %cst_42 {dimension_numbers = #tpu.dot_dimension_numbers<[1], [0], [0], [1], [0, 0, 1, 1], [], []>} : vector<16x24xbf16>, vector<24x64xbf16>, vector<16x64xf32> -> vector<16x64xf32>
    %116 = tpu.concatenate %91, %115 in 1 : vector<16x64xf32>, vector<16x64xf32> -> vector<16x128xf32>
    %117 = arith.truncf %116 : vector<16x128xf32> to vector<16x128xbf16>
    %c0_43 = arith.constant 0 : index
    %c0_44 = arith.constant 0 : index
    %118 = vector.load %arg11[%c0_43, %c0_44] : memref<128x128xbf16, #tpu.memory_space<vmem>>, vector<128x128xbf16>
    %cst_45 = arith.constant dense<0.000000e+00> : vector<16x128xf32>
    %119 = tpu.matmul %117, %118, %cst_45 {dimension_numbers = #tpu.dot_dimension_numbers<[1], [0], [0], [1], [0, 0, 1, 1], [], []>} : vector<16x128xbf16>, vector<128x128xbf16>, vector<16x128xf32> -> vector<16x128xf32>
    %c0_46 = arith.constant 0 : index
    %c0_47 = arith.constant 0 : index
    %120 = vector.load %arg12[%c0_46, %c0_47] : memref<1x128xf32, #tpu.memory_space<vmem>>, vector<1x128xf32>
    %121 = vector.broadcast %120 : vector<1x128xf32> to vector<16x128xf32>
    %122 = arith.addf %119, %121 : vector<16x128xf32>
    %c0_48 = arith.constant 0 : index
    %c0_49 = arith.constant 0 : index
    %c0_50 = arith.constant 0 : index
    %123 = vector.load %arg13[%c0_48, %c0_49, %c0_50] : memref<1x16x128xf32, #tpu.memory_space<vmem>>, vector<1x16x128xf32>
    %124 = vector.shape_cast %123 : vector<1x16x128xf32> to vector<16x128xf32>
    %125 = vector.shape_cast %122 : vector<16x128xf32> to vector<1x16x128xf32>
    tpu.vector_store %arg13[%c0_48, %c0_49, %c0_50], %125 {strides = array<i32>} : memref<1x16x128xf32, #tpu.memory_space<vmem>>, vector<1x16x128xf32>,
    return
  }
  func.func @transform_0(%arg0: i32, %arg1: i32) -> (i32, i32, i32) {
    %c0_i32 = arith.constant 0 : i32
    %c0_i32_0 = arith.constant 0 : i32
    return %arg0, %arg1, %c0_i32 : i32, i32, i32
  }
  func.func @transform_1(%arg0: i32, %arg1: i32) -> (i32, i32) {
    %c0_i32 = arith.constant 0 : i32
    %c0_i32_0 = arith.constant 0 : i32
    %c0_i32_1 = arith.constant 0 : i32
    return %c0_i32, %c0_i32_0 : i32, i32
  }
  func.func @transform_2(%arg0: i32, %arg1: i32) -> (i32, i32) {
    %c0_i32 = arith.constant 0 : i32
    %c0_i32_0 = arith.constant 0 : i32
    %c0_i32_1 = arith.constant 0 : i32
    return %c0_i32, %c0_i32_0 : i32, i32
  }
  func.func @transform_3(%arg0: i32, %arg1: i32) -> (i32, i32, i32) {
    %c0_i32 = arith.constant 0 : i32
    %c0_i32_0 = arith.constant 0 : i32
    %c0_i32_1 = arith.constant 0 : i32
    return %arg0, %c0_i32, %c0_i32_0 : i32, i32, i32
  }
  func.func @transform_4(%arg0: i32, %arg1: i32) -> (i32, i32) {
    %c0_i32 = arith.constant 0 : i32
    %c0_i32_0 = arith.constant 0 : i32
    %c0_i32_1 = arith.constant 0 : i32
    return %c0_i32, %c0_i32_0 : i32, i32
  }
  func.func @transform_5(%arg0: i32, %arg1: i32) -> (i32, i32) {
    %c0_i32 = arith.constant 0 : i32
    %c0_i32_0 = arith.constant 0 : i32
    %c0_i32_1 = arith.constant 0 : i32
    return %c0_i32, %c0_i32_0 : i32, i32
  }
  func.func @transform_6(%arg0: i32, %arg1: i32) -> (i32, i32, i32) {
    %c0_i32 = arith.constant 0 : i32
    %c0_i32_0 = arith.constant 0 : i32
    %c0_i32_1 = arith.constant 0 : i32
    return %arg0, %c0_i32, %c0_i32_0 : i32, i32, i32
  }
  func.func @transform_7(%arg0: i32, %arg1: i32) -> (i32, i32) {
    %c0_i32 = arith.constant 0 : i32
    %c0_i32_0 = arith.constant 0 : i32
    %c0_i32_1 = arith.constant 0 : i32
    return %c0_i32, %c0_i32_0 : i32, i32
  }
  func.func @transform_8(%arg0: i32, %arg1: i32) -> (i32, i32) {
    %c0_i32 = arith.constant 0 : i32
    %c0_i32_0 = arith.constant 0 : i32
    %c0_i32_1 = arith.constant 0 : i32
    return %c0_i32, %c0_i32_0 : i32, i32
  }
  func.func @transform_9(%arg0: i32, %arg1: i32) -> (i32, i32) {
    %c0_i32 = arith.constant 0 : i32
    %c0_i32_0 = arith.constant 0 : i32
    %c0_i32_1 = arith.constant 0 : i32
    return %c0_i32, %c0_i32_0 : i32, i32
  }
  func.func @transform_10(%arg0: i32, %arg1: i32) -> (i32, i32) {
    %c0_i32 = arith.constant 0 : i32
    %c0_i32_0 = arith.constant 0 : i32
    %c0_i32_1 = arith.constant 0 : i32
    return %c0_i32, %c0_i32_0 : i32, i32
  }
  func.func @transform_11(%arg0: i32, %arg1: i32) -> (i32, i32, i32) {
    %c0_i32 = arith.constant 0 : i32
    %c0_i32_0 = arith.constant 0 : i32
    return %arg0, %arg1, %c0_i32 : i32, i32, i32
  }
}

</mosaic_0001>

<llo_original>
// kernel: prenorm_cross_attention.1
$region0: #{prenorm_cross_attention.1}
  #allocation0 [shape = 'u32[]', space=smem, size = 0x4, offset = 0x4, fixed_abs, tag = 'smem constant byte address 0x4 - core index']
  #allocation1 [shape = 'u32[144,128]{1,0:T(1,128)}', space=vmem, size = 0x12000, scoped, tag = 'internal scratch']
  %s0 = inlined_call_operand.vmem [shape: f32[2,16,128], index: 0, kind: input, shape index: {}]
  %s1 = inlined_call_operand.vmem [shape: f32[1,128], index: 1, kind: input, shape index: {}]
  %s2 = inlined_call_operand.vmem [shape: f32[1,128], index: 2, kind: input, shape index: {}]
  %s3 = inlined_call_operand.vmem [shape: f32[2,24,64], index: 3, kind: input, shape index: {}]
  %s4 = inlined_call_operand.vmem [shape: f32[1,64], index: 4, kind: input, shape index: {}]
  %s5 = inlined_call_operand.vmem [shape: f32[1,64], index: 5, kind: input, shape index: {}]
  %s6 = inlined_call_operand.vmem [shape: s32[2,1,24], index: 6, kind: input, shape index: {}]
  %s7 = inlined_call_operand.vmem [shape: bf16[128,128], index: 7, kind: input, shape index: {}]
  %s8 = inlined_call_operand.vmem [shape: bf16[64,256], index: 8, kind: input, shape index: {}]
  %s9 = inlined_call_operand.vmem [shape: bf16[128,128], index: 9, kind: input, shape index: {}]
  %s10 = inlined_call_operand.vmem [shape: f32[1,128], index: 10, kind: input, shape index: {}]
  %s11 = inlined_call_operand.hbm [shape: f32[2,16,128], index: 11, kind: output, shape index: {}]
  %s12 = sld [smem:[#allocation0]]
  $region77: #{prenorm_cross_attention.1} parent=0
    _
  %s14 = ssub.s32 1, %s12
  %s15 = scalar_select 0, %s14, %s12
  $region1: #{prenorm_cross_attention.1} parent=0
    #allocation2 [shape = 'u8[16384]{0}', space=vmem, size = 0x4000, scoped, tag = 'output window, operand 0']
    #allocation3 [shape = 's32[2]{0}', space=sflag, size = 0x8, scoped, tag = 'scoped memory for prenorm_cross_attention.1']
    %16 = vsyncpa [#allocation3], 0
    %s17 = scalar_lea.sflag [#allocation3], 1
    %18 = vsyncpa %s17, 0
    loop: start=0, step=1, limit=4
    $region2: #{prenorm_cross_attention.1} parent=1 // loop_pre_header
      _
    $region3: #{prenorm_cross_attention.1} parent=1 // loop_header
      %s20 = sphi 0, %s24
      %p21 = scmp.ge.s32.totalorder %s20, 4
      %s27 = sphi 0, %s39
      %s28 = sphi 0, %s35
      %s29 = sphi 0, %s27
      %s30 = sphi 0, %s28
      %s31 = sphi 0, %s29
      %s32 = sphi 0, %s30
      %s44 = sphi 0, %s46
      %s47 = sphi 0, %s44
      %s48 = sphi 0, %s47
      %s64 = sphi 0, %s48
      %s68 = sphi 0, %s68
      %s70 = sphi 0, %s68
      %s71 = sphi 0, %s70
      %s85 = sphi 0, %s71
      %s89 = sphi 0, %s89
      %s91 = sphi 0, %s89
      %s92 = sphi 0, %s91
      %s106 = sphi 0, %s92
      %s112 = sphi 0, %s114
      %s115 = sphi 0, %s112
      %s116 = sphi 0, %s115
      %s132 = sphi 0, %s116
      %s136 = sphi 0, %s136
      %s138 = sphi 0, %s136
      %s139 = sphi 0, %s138
      %s153 = sphi 0, %s139
      %s157 = sphi 0, %s157
      %s159 = sphi 0, %s157
      %s160 = sphi 0, %s159
      %s174 = sphi 0, %s160
      %s180 = sphi 0, %s182
      %s183 = sphi 0, %s180
      %s184 = sphi 0, %s183
      %s200 = sphi 0, %s184
      %s204 = sphi 0, %s204
      %s206 = sphi 0, %s204
      %s207 = sphi 0, %s206
      %s221 = sphi 0, %s207
      %s225 = sphi 0, %s225
      %s227 = sphi 0, %s225
      %s228 = sphi 0, %s227
      %s242 = sphi 0, %s228
      %s246 = sphi 0, %s246
      %s248 = sphi 0, %s246
      %s249 = sphi 0, %s248
      %s263 = sphi 0, %s249
      %s267 = sphi 0, %s267
      %s269 = sphi 0, %s267
      %s270 = sphi 0, %s269
      %s284 = sphi 0, %s270
      %s292 = sphi 0, %s294
      %s295 = sphi 0, %s292
      %s296 = sphi 0, %s295
      %s312 = sphi 0, %s296
    $region4: #{prenorm_cross_attention.1} parent=1 // loop_header_branch
      %23 = sbr.rel (%p21) target = $region8
    $region5: #{prenorm_cross_attention.1} parent=1 // loop_body
      %s25 = ssub.s32 %s20, 1
      %s26 = ssub.s32 %s20, 2
      %s33 = sadd.s32 1, %s28
      %p34 = scmp.ge.s32.totalorder %s33, 1
      %s35 = scalar_select %p34, 0, %s33
      %s36 = sadd.s32 1, %s27
      %s37 = scalar_select %p34, %s36, %s27
      %p38 = scmp.ge.s32.totalorder %s37, 2
      %s39 = scalar_select %p38, 0, %s37
      %s40 = ssub.s32 %s27, %s39
      %s41 = ssub.s32 %s28, %s35
      %s42 = sor.u32 %s40, %s41
      %p43 = scmp.eq.s32.totalorder %s42, 0
      %s45 = sadd.s32 %s44, 1
      %s46 = scalar_select %p43, %s44, %s45
      %p49 = pneg %p43
      %p50 = scmp.eq.s32.totalorder %s20, 1
      %p51 = por %p49, %p50
      %p52 = scmp.ne.s32.totalorder %s44, %s47
      %p53 = scmp.eq.s32.totalorder %s20, 0
      %p54 = por %p52, %p53
      %p55 = scmp.ne.s32.totalorder %s44, %s47
      %p56 = scmp.eq.s32.totalorder %s25, 1
      %p57 = por %p55, %p56
      %p58 = scmp.ne.s32.totalorder %s47, %s48
      %p59 = scmp.eq.s32.totalorder %s25, 0
      %p60 = por %p58, %p59
      %p61 = scmp.ne.s32.totalorder %s47, %s48
      %p62 = scmp.eq.s32.totalorder %s26, 1
      %p63 = por %p61, %p62
      %p65 = scmp.ne.s32.totalorder %s48, %s64
      %p66 = scmp.eq.s32.totalorder %s26, 0
      %p67 = por %p65, %p66
      %s69 = sadd.s32 %s68, 1
      %p72 = scmp.eq.s32.totalorder %s20, 1
      %p73 = scmp.ne.s32.totalorder %s68, %s70
      %p74 = scmp.eq.s32.totalorder %s20, 0
      %p75 = por %p73, %p74
      %p76 = scmp.ne.s32.totalorder %s68, %s70
      %p77 = scmp.eq.s32.totalorder %s25, 1
      %p78 = por %p76, %p77
      %p79 = scmp.ne.s32.totalorder %s70, %s71
      %p80 = scmp.eq.s32.totalorder %s25, 0
      %p81 = por %p79, %p80
      %p82 = scmp.ne.s32.totalorder %s70, %s71
      %p83 = scmp.eq.s32.totalorder %s26, 1
      %p84 = por %p82, %p83
      %p86 = scmp.ne.s32.totalorder %s71, %s85
      %p87 = scmp.eq.s32.totalorder %s26, 0
      %p88 = por %p86, %p87
      %s90 = sadd.s32 %s89, 1
      %p93 = scmp.eq.s32.totalorder %s20, 1
      %p94 = scmp.ne.s32.totalorder %s89, %s91
      %p95 = scmp.eq.s32.totalorder %s20, 0
      %p96 = por %p94, %p95
      %p97 = scmp.ne.s32.totalorder %s89, %s91
      %p98 = scmp.eq.s32.totalorder %s25, 1
      %p99 = por %p97, %p98
      %p100 = scmp.ne.s32.totalorder %s91, %s92
      %p101 = scmp.eq.s32.totalorder %s25, 0
      %p102 = por %p100, %p101
      %p103 = scmp.ne.s32.totalorder %s91, %s92
      %p104 = scmp.eq.s32.totalorder %s26, 1
      %p105 = por %p103, %p104
      %p107 = scmp.ne.s32.totalorder %s92, %s106
      %p108 = scmp.eq.s32.totalorder %s26, 0
      %p109 = por %p107, %p108
      %s110 = ssub.s32 %s27, %s39
      %p111 = scmp.eq.s32.totalorder %s110, 0
      %s113 = sadd.s32 %s112, 1
      %s114 = scalar_select %p111, %s112, %s113
      %p117 = pneg %p111
      %p118 = scmp.eq.s32.totalorder %s20, 1
      %p119 = por %p117, %p118
      %p120 = scmp.ne.s32.totalorder %s112, %s115
      %p121 = scmp.eq.s32.totalorder %s20, 0
      %p122 = por %p120, %p121
      %p123 = scmp.ne.s32.totalorder %s112, %s115
      %p124 = scmp.eq.s32.totalorder %s25, 1
      %p125 = por %p123, %p124
      %p126 = scmp.ne.s32.totalorder %s115, %s116
      %p127 = scmp.eq.s32.totalorder %s25, 0
      %p128 = por %p126, %p127
      %p129 = scmp.ne.s32.totalorder %s115, %s116
      %p130 = scmp.eq.s32.totalorder %s26, 1
      %p131 = por %p129, %p130
      %p133 = scmp.ne.s32.totalorder %s116, %s132
      %p134 = scmp.eq.s32.totalorder %s26, 0
      %p135 = por %p133, %p134
      %s137 = sadd.s32 %s136, 1
      %p140 = scmp.eq.s32.totalorder %s20, 1
      %p141 = scmp.ne.s32.totalorder %s136, %s138
      %p142 = scmp.eq.s32.totalorder %s20, 0
      %p143 = por %p141, %p142
      %p144 = scmp.ne.s32.totalorder %s136, %s138
      %p145 = scmp.eq.s32.totalorder %s25, 1
      %p146 = por %p144, %p145
      %p147 = scmp.ne.s32.totalorder %s138, %s139
      %p148 = scmp.eq.s32.totalorder %s25, 0
      %p149 = por %p147, %p148
      %p150 = scmp.ne.s32.totalorder %s138, %s139
      %p151 = scmp.eq.s32.totalorder %s26, 1
      %p152 = por %p150, %p151
      %p154 = scmp.ne.s32.totalorder %s139, %s153
      %p155 = scmp.eq.s32.totalorder %s26, 0
      %p156 = por %p154, %p155
      %s158 = sadd.s32 %s157, 1
      %p161 = scmp.eq.s32.totalorder %s20, 1
      %p162 = scmp.ne.s32.totalorder %s157, %s159
      %p163 = scmp.eq.s32.totalorder %s20, 0
      %p164 = por %p162, %p163
      %p165 = scmp.ne.s32.totalorder %s157, %s159
      %p166 = scmp.eq.s32.totalorder %s25, 1
      %p167 = por %p165, %p166
      %p168 = scmp.ne.s32.totalorder %s159, %s160
      %p169 = scmp.eq.s32.totalorder %s25, 0
      %p170 = por %p168, %p169
      %p171 = scmp.ne.s32.totalorder %s159, %s160
      %p172 = scmp.eq.s32.totalorder %s26, 1
      %p173 = por %p171, %p172
      %p175 = scmp.ne.s32.totalorder %s160, %s174
      %p176 = scmp.eq.s32.totalorder %s26, 0
      %p177 = por %p175, %p176
      %s178 = ssub.s32 %s27, %s39
      %p179 = scmp.eq.s32.totalorder %s178, 0
      %s181 = sadd.s32 %s180, 1
      %s182 = scalar_select %p179, %s180, %s181
      %p185 = pneg %p179
      %p186 = scmp.eq.s32.totalorder %s20, 1
      %p187 = por %p185, %p186
      %p188 = scmp.ne.s32.totalorder %s180, %s183
      %p189 = scmp.eq.s32.totalorder %s20, 0
      %p190 = por %p188, %p189
      %p191 = scmp.ne.s32.totalorder %s180, %s183
      %p192 = scmp.eq.s32.totalorder %s25, 1
      %p193 = por %p191, %p192
      %p194 = scmp.ne.s32.totalorder %s183, %s184
      %p195 = scmp.eq.s32.totalorder %s25, 0
      %p196 = por %p194, %p195
      %p197 = scmp.ne.s32.totalorder %s183, %s184
      %p198 = scmp.eq.s32.totalorder %s26, 1
      %p199 = por %p197, %p198
      %p201 = scmp.ne.s32.totalorder %s184, %s200
      %p202 = scmp.eq.s32.totalorder %s26, 0
      %p203 = por %p201, %p202
      %s205 = sadd.s32 %s204, 1
      %p208 = scmp.eq.s32.totalorder %s20, 1
      %p209 = scmp.ne.s32.totalorder %s204, %s206
      %p210 = scmp.eq.s32.totalorder %s20, 0
      %p211 = por %p209, %p210
      %p212 = scmp.ne.s32.totalorder %s204, %s206
      %p213 = scmp.eq.s32.totalorder %s25, 1
      %p214 = por %p212, %p213
      %p215 = scmp.ne.s32.totalorder %s206, %s207
      %p216 = scmp.eq.s32.totalorder %s25, 0
      %p217 = por %p215, %p216
      %p218 = scmp.ne.s32.totalorder %s206, %s207
      %p219 = scmp.eq.s32.totalorder %s26, 1
      %p220 = por %p218, %p219
      %p222 = scmp.ne.s32.totalorder %s207, %s221
      %p223 = scmp.eq.s32.totalorder %s26, 0
      %p224 = por %p222, %p223
      %s226 = sadd.s32 %s225, 1
      %p229 = scmp.eq.s32.totalorder %s20, 1
      %p230 = scmp.ne.s32.totalorder %s225, %s227
      %p231 = scmp.eq.s32.totalorder %s20, 0
      %p232 = por %p230, %p231
      %p233 = scmp.ne.s32.totalorder %s225, %s227
      %p234 = scmp.eq.s32.totalorder %s25, 1
      %p235 = por %p233, %p234
      %p236 = scmp.ne.s32.totalorder %s227, %s228
      %p237 = scmp.eq.s32.totalorder %s25, 0
      %p238 = por %p236, %p237
      %p239 = scmp.ne.s32.totalorder %s227, %s228
      %p240 = scmp.eq.s32.totalorder %s26, 1
      %p241 = por %p239, %p240
      %p243 = scmp.ne.s32.totalorder %s228, %s242
      %p244 = scmp.eq.s32.totalorder %s26, 0
      %p245 = por %p243, %p244
      %s247 = sadd.s32 %s246, 1
      %p250 = scmp.eq.s32.totalorder %s20, 1
      %p251 = scmp.ne.s32.totalorder %s246, %s248
      %p252 = scmp.eq.s32.totalorder %s20, 0
      %p253 = por %p251, %p252
      %p254 = scmp.ne.s32.totalorder %s246, %s248
      %p255 = scmp.eq.s32.totalorder %s25, 1
      %p256 = por %p254, %p255
      %p257 = scmp.ne.s32.totalorder %s248, %s249
      %p258 = scmp.eq.s32.totalorder %s25, 0
      %p259 = por %p257, %p258
      %p260 = scmp.ne.s32.totalorder %s248, %s249
      %p261 = scmp.eq.s32.totalorder %s26, 1
      %p262 = por %p260, %p261
      %p264 = scmp.ne.s32.totalorder %s249, %s263
      %p265 = scmp.eq.s32.totalorder %s26, 0
      %p266 = por %p264, %p265
      %s268 = sadd.s32 %s267, 1
      %p271 = scmp.eq.s32.totalorder %s20, 1
      %p272 = scmp.ne.s32.totalorder %s267, %s269
      %p273 = scmp.eq.s32.totalorder %s20, 0
      %p274 = por %p272, %p273
      %p275 = scmp.ne.s32.totalorder %s267, %s269
      %p276 = scmp.eq.s32.totalorder %s25, 1
      %p277 = por %p275, %p276
      %p278 = scmp.ne.s32.totalorder %s269, %s270
      %p279 = scmp.eq.s32.totalorder %s25, 0
      %p280 = por %p278, %p279
      %p281 = scmp.ne.s32.totalorder %s269, %s270
      %p282 = scmp.eq.s32.totalorder %s26, 1
      %p283 = por %p281, %p282
      %p285 = scmp.ne.s32.totalorder %s270, %s284
      %p286 = scmp.eq.s32.totalorder %s26, 0
      %p287 = por %p285, %p286
      %s288 = ssub.s32 %s27, %s39
      %s289 = ssub.s32 %s28, %s35
      %s290 = sor.u32 %s288, %s289
      %p291 = scmp.eq.s32.totalorder %s290, 0
      %s293 = sadd.s32 %s292, 1
      %s294 = scalar_select %p291, %s292, %s293
      %p297 = pneg %p291
      %p298 = scmp.eq.s32.totalorder %s20, 1
      %p299 = por %p297, %p298
      %p300 = scmp.ne.s32.totalorder %s292, %s295
      %p301 = scmp.eq.s32.totalorder %s20, 0
      %p302 = por %p300, %p301
      %p303 = scmp.ne.s32.totalorder %s292, %s295
      %p304 = scmp.eq.s32.totalorder %s25, 1
      %p305 = por %p303, %p304
      %p306 = scmp.ne.s32.totalorder %s295, %s296
      %p307 = scmp.eq.s32.totalorder %s25, 0
      %p308 = por %p306, %p307
      %p309 = scmp.ne.s32.totalorder %s295, %s296
      %p310 = scmp.eq.s32.totalorder %s26, 1
      %p311 = por %p309, %p310
      %p313 = scmp.ne.s32.totalorder %s296, %s312
      %p314 = scmp.eq.s32.totalorder %s26, 0
      %p315 = por %p313, %p314
      %p316 = scmp.le.s32.totalorder 1, %s20
      %p317 = scmp.lt.s32.totalorder %s20, 3
      %p318 = pnand %p316, %p317
      %p319 = pneg %p318
      // Predicated region
      $region9: #{prenorm_cross_attention.1} parent=5 // pred_check
        _
      $region10: #{prenorm_cross_attention.1} parent=5 // pred_check_branch
        %321 = sbr.rel (%p318) target = $region12
      $region11: #{prenorm_cross_attention.1} parent=5 // pred_region
        %s322 = ssub.s32 %s20, 1
        // Predicated region
        $region13: #{prenorm_cross_attention.1} parent=11 // pred_check
          %p323 = pneg %p81
        $region14: #{prenorm_cross_attention.1} parent=11 // pred_check_branch
          %325 = sbr.rel (%p323) target = $region16
        $region15: #{prenorm_cross_attention.1} parent=11 // pred_region
          _
        $region16: #{prenorm_cross_attention.1} parent=11 // pred_fallthru
          _
        // Predicated region
        $region17: #{prenorm_cross_attention.1} parent=11 // pred_check
          %p326 = pneg %p102
        $region18: #{prenorm_cross_attention.1} parent=11 // pred_check_branch
          %328 = sbr.rel (%p326) target = $region20
        $region19: #{prenorm_cross_attention.1} parent=11 // pred_region
          _
        $region20: #{prenorm_cross_attention.1} parent=11 // pred_fallthru
          _
        // Predicated region
        $region21: #{prenorm_cross_attention.1} parent=11 // pred_check
          %p329 = pneg %p149
        $region22: #{prenorm_cross_attention.1} parent=11 // pred_check_branch
          %331 = sbr.rel (%p329) target = $region24
        $region23: #{prenorm_cross_attention.1} parent=11 // pred_region
          _
        $region24: #{prenorm_cross_attention.1} parent=11 // pred_fallthru
          _
        // Predicated region
        $region25: #{prenorm_cross_attention.1} parent=11 // pred_check
          %p332 = pneg %p170
        $region26: #{prenorm_cross_attention.1} parent=11 // pred_check_branch
          %334 = sbr.rel (%p332) target = $region28
        $region27: #{prenorm_cross_attention.1} parent=11 // pred_region
          _
        $region28: #{prenorm_cross_attention.1} parent=11 // pred_fallthru
          _
        // Predicated region
        $region29: #{prenorm_cross_attention.1} parent=11 // pred_check
          %p335 = pneg %p217
        $region30: #{prenorm_cross_attention.1} parent=11 // pred_check_branch
          %337 = sbr.rel (%p335) target = $region32
        $region31: #{prenorm_cross_attention.1} parent=11 // pred_region
          _
        $region32: #{prenorm_cross_attention.1} parent=11 // pred_fallthru
          _
        // Predicated region
        $region33: #{prenorm_cross_attention.1} parent=11 // pred_check
          %p338 = pneg %p238
        $region34: #{prenorm_cross_attention.1} parent=11 // pred_check_branch
          %340 = sbr.rel (%p338) target = $region36
        $region35: #{prenorm_cross_attention.1} parent=11 // pred_region
          _
        $region36: #{prenorm_cross_attention.1} parent=11 // pred_fallthru
          _
        // Predicated region
        $region37: #{prenorm_cross_attention.1} parent=11 // pred_check
          %p341 = pneg %p259
        $region38: #{prenorm_cross_attention.1} parent=11 // pred_check_branch
          %343 = sbr.rel (%p341) target = $region40
        $region39: #{prenorm_cross_attention.1} parent=11 // pred_region
          _
        $region40: #{prenorm_cross_attention.1} parent=11 // pred_fallthru
          _
        // Predicated region
        $region41: #{prenorm_cross_attention.1} parent=11 // pred_check
          %p344 = pneg %p280
        $region42: #{prenorm_cross_attention.1} parent=11 // pred_check_branch
          %346 = sbr.rel (%p344) target = $region44
        $region43: #{prenorm_cross_attention.1} parent=11 // pred_region
          _
        $region44: #{prenorm_cross_attention.1} parent=11 // pred_fallthru
          _
      $region12: #{prenorm_cross_attention.1} parent=5 // pred_fallthru
        _
      %p347 = scmp.lt.s32.totalorder %s20, 2
      // Predicated region
      $region45: #{prenorm_cross_attention.1} parent=5 // pred_check
        %p348 = pneg %p347
      $region46: #{prenorm_cross_attention.1} parent=5 // pred_check_branch
        %350 = sbr.rel (%p348) target = $region48
      $region47: #{prenorm_cross_attention.1} parent=5 // pred_region
        // Predicated region
        $region49: #{prenorm_cross_attention.1} parent=47 // pred_check
          %p351 = pneg %p54
        $region50: #{prenorm_cross_attention.1} parent=47 // pred_check_branch
          %353 = sbr.rel (%p351) target = $region52
        $region51: #{prenorm_cross_attention.1} parent=47 // pred_region
          %s354 = smul.u32 2, %s28
          %p355 = scmp.lt.s32.totalorder %s27, 1
          %s356 = scalar_select %p355, %s27, 1
          %p357 = scmp.lt.s32.totalorder %s354, 1
          %s358 = scalar_select %p357, %s354, 1
          %s359 = smul.addr %s356, 2
          %s360 = sadd.s32 %s358, %s359
          %s361 = smul.addr %s360, 8
          %s362 = scalar_lea.vmem %s0, %s361
          %s363 = smul.u32 2, %s28
        $region52: #{prenorm_cross_attention.1} parent=47 // pred_fallthru
          _
        // Predicated region
        $region53: #{prenorm_cross_attention.1} parent=47 // pred_check
          %p364 = pneg %p122
        $region54: #{prenorm_cross_attention.1} parent=47 // pred_check_branch
          %366 = sbr.rel (%p364) target = $region56
        $region55: #{prenorm_cross_attention.1} parent=47 // pred_region
          %p367 = scmp.lt.s32.totalorder %s27, 1
          %s368 = scalar_select %p367, %s27, 1
          %s369 = smul.addr %s368, 3
          %s370 = smul.addr %s369, 8
          %s371 = scalar_lea.vmem %s3, %s370
        $region56: #{prenorm_cross_attention.1} parent=47 // pred_fallthru
          _
        // Predicated region
        $region57: #{prenorm_cross_attention.1} parent=47 // pred_check
          %p372 = pneg %p190
        $region58: #{prenorm_cross_attention.1} parent=47 // pred_check_branch
          %374 = sbr.rel (%p372) target = $region60
        $region59: #{prenorm_cross_attention.1} parent=47 // pred_region
          %p375 = scmp.lt.s32.totalorder %s27, 1
          %s376 = scalar_select %p375, %s27, 1
          %s377 = scalar_lea.vmem %s6, %s376
        $region60: #{prenorm_cross_attention.1} parent=47 // pred_fallthru
          _
      $region48: #{prenorm_cross_attention.1} parent=5 // pred_fallthru
        _
      %p378 = scmp.le.s32.totalorder 1, %s20
      %p379 = scmp.lt.s32.totalorder %s20, 3
      %p380 = pnand %p378, %p379
      %p381 = pneg %p380
      // Predicated region
      $region61: #{prenorm_cross_attention.1} parent=5 // pred_check
        _
      $region62: #{prenorm_cross_attention.1} parent=5 // pred_check_branch
        %383 = sbr.rel (%p380) target = $region64
      $region63: #{prenorm_cross_attention.1} parent=5 // pred_region
        %s384 = ssub.s32 %s20, 1
        %s385 = smul.u32 2, %s30
        %p386 = scmp.lt.s32.totalorder %s29, 1
        %s387 = scalar_select %p386, %s29, 1
        %p388 = scmp.lt.s32.totalorder %s385, 1
        %s389 = scalar_select %p388, %s385, 1
        %s390 = smul.addr %s387, 2
        %s391 = sadd.s32 %s389, %s390
        %s392 = smul.addr %s391, 8
        %s393 = scalar_lea.vmem %s0, %s392
        %p394 = pneg %p60
        %p395 = pneg %p57
        %p396 = pneg %p81
        %p397 = pneg %p78
        %p398 = pneg %p102
        %p399 = pneg %p99
        %p400 = scmp.lt.s32.totalorder %s29, 1
        %s401 = scalar_select %p400, %s29, 1
        %s402 = smul.addr %s401, 3
        %s403 = smul.addr %s402, 8
        %s404 = scalar_lea.vmem %s3, %s403
        %p405 = pneg %p128
        %p406 = pneg %p125
        %p407 = pneg %p149
        %p408 = pneg %p146
        %p409 = pneg %p170
        %p410 = pneg %p167
        %p411 = scmp.lt.s32.totalorder %s29, 1
        %s412 = scalar_select %p411, %s29, 1
        %s413 = scalar_lea.vmem %s6, %s412
        %p414 = pneg %p196
        %p415 = pneg %p193
        %p416 = pneg %p217
        %p417 = pneg %p214
        %p418 = pneg %p238
        %p419 = pneg %p235
        %p420 = pneg %p259
        %p421 = pneg %p256
        %p422 = pneg %p280
        %p423 = pneg %p277
        %p424 = pneg %p308
        %p425 = pneg %p305
        %s426 = sand.u32 %s295, 1
        %s427 = scalar_lea.sflag [#allocation3], %s426
        %s428 = sand.u32 %s295, 1
        %s429 = smul.addr %s428, 16
        %s430 = scalar_lea.vmem [#allocation2], %s429
        %s431 = smul.u32 2, %s30
        %p432 = scmp.lt.s32.totalorder %s29, 1
        %s433 = scalar_select %p432, %s29, 1
        %p434 = scmp.lt.s32.totalorder %s431, 1
        %s435 = scalar_select %p434, %s431, 1
        %s436 = smul.addr %s433, 2
        %s437 = sadd.s32 %s435, %s436
        %s438 = smul.addr %s437, 8
        %s439 = scalar_lea.vmem %s0, %s438
        %s440 = smul.u32 2, %s30
        %p441 = scmp.lt.s32.totalorder %s29, 1
        %s442 = scalar_select %p441, %s29, 1
        %s443 = smul.addr %s442, 3
        %s444 = smul.addr %s443, 8
        %s445 = scalar_lea.vmem %s3, %s444
        %p446 = scmp.lt.s32.totalorder %s29, 1
        %s447 = scalar_select %p446, %s29, 1
        %s448 = scalar_lea.vmem %s6, %s447
        %s449 = smul.u32 2, %s30
        %v451 = vld [vmem:[%s439] sm:$0xff]
        %v452 = vld [vmem:[%s439 + $0x8] sm:$0xff]
        %v453 = vld [vmem:[%s445] sm:$0xff]
        %v454 = vld [vmem:[%s445 + $0x8] sm:$0xff]
        %v455 = vld [vmem:[%s445 + $0x10] sm:$0xff]
        %v456 = vld [vmem:[%s1] sm:$0x1]
        %v457 = vld [vmem:[%s2] sm:$0x1]
        %458 = vadd.xlane.f32.xlu0 %v451
        %v459 = vpop.xlane.xlu0 %458
        %460 = vadd.xlane.f32.xlu0 %v452
        %v461 = vpop.xlane.xlu0 %460
        %v462 = vrcp.pop 128.0
        %v463 = vmul.f32 %v459, %v462
        %v464 = vmul.f32 %v461, %v462
        %v465 = vsub.f32 %v451, %v463
        %v466 = vsub.f32 %v452, %v464
        %v467 = vmul.f32 %v465, %v465
        %v468 = vmul.f32 %v466, %v466
        %469 = vadd.xlane.f32.xlu0 %v467
        %v470 = vpop.xlane.xlu0 %469
        %471 = vadd.xlane.f32.xlu0 %v468
        %v472 = vpop.xlane.xlu0 %471
        %v473 = vmul.f32 %v470, %v462
        %v474 = vmul.f32 %v472, %v462
        %v475 = vadd.f32 %v473, 1e-05
        %v476 = vadd.f32 %v474, 1e-05
        %v477 = vrsqrt.pop %v475
        %v478 = vrsqrt.pop %v476
        %v479 = vmul.f32 %v465, %v477
        %v480 = vmul.f32 %v466, %v478
        %v482 = vlaneseq
        %v483 = vshrl.u32 %v482, 7
        %v484 = vsub.s32 0, %v483
        %v485 = vrot.slane %v456, %v484
        %v487 = vmul.f32 %v479, %v485
        %v488 = vmul.f32 %v480, %v485
        %v490 = vlaneseq
        %v491 = vshrl.u32 %v490, 7
        %v492 = vsub.s32 0, %v491
        %v493 = vrot.slane %v457, %v492
        %v495 = vadd.f32 %v487, %v493
        %v496 = vadd.f32 %v488, %v493
        %v497 = vld [vmem:[%s4] sm:$0x1]
        %v498 = vld [vmem:[%s5] sm:$0x1]
        %vm499 = vcmask 523264
        %v500 = vsel %vm499, %v453, 0.0
        %501 = vadd.xlane.f32.xlu0 %v500
        %v502 = vpop.xlane.xlu0 %501
        %v503 = vsel %vm499, %v454, 0.0
        %504 = vadd.xlane.f32.xlu0 %v503
        %v505 = vpop.xlane.xlu0 %504
        %v506 = vsel %vm499, %v455, 0.0
        %507 = vadd.xlane.f32.xlu0 %v506
        %v508 = vpop.xlane.xlu0 %507
        %v509 = vrcp.pop 64.0
        %v510 = vmul.f32 %v502, %v509
        %v511 = vmul.f32 %v505, %v509
        %v512 = vmul.f32 %v508, %v509
        %v513 = vsub.f32 %v453, %v510
        %v514 = vsub.f32 %v454, %v511
        %v515 = vsub.f32 %v455, %v512
        %v516 = vmul.f32 %v513, %v513
        %v517 = vmul.f32 %v514, %v514
        %v518 = vmul.f32 %v515, %v515
        %v519 = vsel %vm499, %v516, 0.0
        %520 = vadd.xlane.f32.xlu0 %v519
        %v521 = vpop.xlane.xlu0 %520
        %v522 = vsel %vm499, %v517, 0.0
        %523 = vadd.xlane.f32.xlu0 %v522
        %v524 = vpop.xlane.xlu0 %523
        %v525 = vsel %vm499, %v518, 0.0
        %526 = vadd.xlane.f32.xlu0 %v525
        %v527 = vpop.xlane.xlu0 %526
        %v528 = vmul.f32 %v521, %v509
        %v529 = vmul.f32 %v524, %v509
        %v530 = vmul.f32 %v527, %v509
        %v531 = vadd.f32 %v528, 1e-05
        %v532 = vadd.f32 %v529, 1e-05
        %v533 = vadd.f32 %v530, 1e-05
        %v534 = vrsqrt.pop %v531
        %v535 = vrsqrt.pop %v532
        %v536 = vrsqrt.pop %v533
        %v537 = vmul.f32 %v513, %v534
        %v538 = vmul.f32 %v514, %v535
        %v539 = vmul.f32 %v515, %v536
        %v541 = vlaneseq
        %v542 = vshrl.u32 %v541, 7
        %v543 = vsub.s32 0, %v542
        %v544 = vrot.slane %v497, %v543
        %v546 = vmul.f32 %v537, %v544
        %v547 = vmul.f32 %v538, %v544
        %v548 = vmul.f32 %v539, %v544
        %v550 = vlaneseq
        %v551 = vshrl.u32 %v550, 7
        %v552 = vsub.s32 0, %v551
        %v553 = vrot.slane %v498, %v552
        %v555 = vadd.f32 %v546, %v553
        %v556 = vadd.f32 %v547, %v553
        %v557 = vadd.f32 %v548, %v553
        %v558 = vpack.c.bf16 %v496, %v495
        %v559 = vpack.c.bf16 %v556, %v555
        %v560 = vpack.c.bf16 %v557, %v557
        %v561 = vld [vmem:[%s7] sm:$0xf]
        %v562 = vld [vmem:[%s7 + $0x4] sm:$0xf]
        %v563 = vld [vmem:[%s7 + $0x8] sm:$0xf]
        %v564 = vld [vmem:[%s7 + $0xc] sm:$0xf]
        %v565 = vld [vmem:[%s7 + $0x10] sm:$0xf]
        %v566 = vld [vmem:[%s7 + $0x14] sm:$0xf]
        %v567 = vld [vmem:[%s7 + $0x18] sm:$0xf]
        %v568 = vld [vmem:[%s7 + $0x1c] sm:$0xf]
        %v569 = vld [vmem:[%s7 + $0x20] sm:$0xf]
        %v570 = vld [vmem:[%s7 + $0x24] sm:$0xf]
        %v571 = vld [vmem:[%s7 + $0x28] sm:$0xf]
        %v572 = vld [vmem:[%s7 + $0x2c] sm:$0xf]
        %v573 = vld [vmem:[%s7 + $0x30] sm:$0xf]
        %v574 = vld [vmem:[%s7 + $0x34] sm:$0xf]
        %v575 = vld [vmem:[%s7 + $0x38] sm:$0xf]
        %v576 = vld [vmem:[%s7 + $0x3c] sm:$0xf]
        %v593 = vunpack.c.l.b16 %v561
        %v594 = vunpack.c.l.b16 %v562
        %v595 = vunpack.c.l.b16 %v563
        %v596 = vunpack.c.l.b16 %v564
        %v597 = vunpack.c.l.b16 %v565
        %v598 = vunpack.c.l.b16 %v566
        %v599 = vunpack.c.l.b16 %v567
        %v600 = vunpack.c.l.b16 %v568
        %v601 = vunpack.c.l.b16 %v569
        %v602 = vunpack.c.l.b16 %v570
        %v603 = vunpack.c.l.b16 %v571
        %v604 = vunpack.c.l.b16 %v572
        %v605 = vunpack.c.l.b16 %v573
        %v606 = vunpack.c.l.b16 %v574
        %v607 = vunpack.c.l.b16 %v575
        %v608 = vunpack.c.l.b16 %v576
        %v609 = vpack.c.b16 %v594, %v593
        %v610 = vpack.c.b16 %v596, %v595
        %v611 = vpack.c.b16 %v598, %v597
        %v612 = vpack.c.b16 %v600, %v599
        %v613 = vpack.c.b16 %v602, %v601
        %v614 = vpack.c.b16 %v604, %v603
        %v615 = vpack.c.b16 %v606, %v605
        %v616 = vpack.c.b16 %v608, %v607
        %625 = vmatprep.subr.bf16.mxu0 0
        %626 = vmatpush1.bf16.msra.mxu0 %v609
        %627 = vmatprep.subr.bf16.mxu0 0
        %628 = vmatpush1.bf16.msra.mxu0 %v610
        %629 = vmatprep.subr.bf16.mxu0 0
        %630 = vmatpush1.bf16.msra.mxu0 %v611
        %631 = vmatprep.subr.bf16.mxu0 0
        %632 = vmatpush1.bf16.msra.mxu0 %v612
        %633 = vmatprep.subr.bf16.mxu0 0
        %634 = vmatpush1.bf16.msra.mxu0 %v613
        %635 = vmatprep.subr.bf16.mxu0 0
        %636 = vmatpush1.bf16.msra.mxu0 %v614
        %637 = vmatprep.subr.bf16.mxu0 0
        %638 = vmatpush1.bf16.msra.mxu0 %v615
        %639 = vmatprep.subr.bf16.mxu0 0
        %640 = vmatpush1.bf16.msra.mxu0 %v616
        %641 = vmatprep.subr.bf16.mxu0 0
        %642 = vmatpush1.bf16.msra.mxu0 0
        %643 = vmatprep.subr.bf16.mxu0 0
        %644 = vmatpush1.bf16.msra.mxu0 0
        %645 = vmatprep.subr.bf16.mxu0 0
        %646 = vmatpush1.bf16.msra.mxu0 0
        %647 = vmatprep.subr.bf16.mxu0 0
        %648 = vmatpush1.bf16.msra.mxu0 0
        %649 = vmatprep.subr.bf16.mxu0 0
        %650 = vmatpush1.bf16.msra.mxu0 0
        %651 = vmatprep.subr.bf16.mxu0 0
        %652 = vmatpush1.bf16.msra.mxu0 0
        %653 = vmatprep.subr.bf16.mxu0 0
        %654 = vmatpush1.bf16.msra.mxu0 0
        %655 = vmatprep.subr.bf16.mxu0 0
        %656 = vmatpush1.bf16.msra.mxu0 0
        %657 = vmatprep.mubr.bf16.mxu0 0
        %658 = vmatmul.mubr.bf16.gmra.mrb[0].mxu0 %v558
        %v659 = vpop.f32.mrb[0].mxu0
        %v660 = vadd.f32 0.0, %v659
        %v661 = vpop.f32.mrb[0].mxu0
        %v662 = vpop.f32.mrb[0].mxu0
        %v663 = vadd.f32 0.0, %v662
        %v664 = vpop.f32.mrb[0].mxu0
        %665 = vdwg.mxu0
        %v666 = vld [vmem:[%s8] sm:$0xff]
        %v667 = vld [vmem:[%s8 + $0x8] sm:$0xff]
        %v668 = vld [vmem:[%s8 + $0x10] sm:$0xff]
        %v669 = vld [vmem:[%s8 + $0x18] sm:$0xff]
        %v670 = vld [vmem:[%s8 + $0x20] sm:$0xff]
        %v671 = vld [vmem:[%s8 + $0x28] sm:$0xff]
        %v672 = vld [vmem:[%s8 + $0x30] sm:$0xff]
        %v673 = vld [vmem:[%s8 + $0x38] sm:$0xff]
        %v682 = vunpack.c.l.b16 %v666
        %v683 = vunpack.c.h.b16 %v666
        %v684 = vunpack.c.l.b16 %v667
        %v685 = vunpack.c.h.b16 %v667
        %v686 = vunpack.c.l.b16 %v668
        %v687 = vunpack.c.h.b16 %v668
        %v688 = vunpack.c.l.b16 %v669
        %v689 = vunpack.c.h.b16 %v669
        %v690 = vunpack.c.l.b16 %v670
        %v691 = vunpack.c.h.b16 %v670
        %v692 = vunpack.c.l.b16 %v671
        %v693 = vunpack.c.h.b16 %v671
        %v694 = vunpack.c.l.b16 %v672
        %v695 = vunpack.c.h.b16 %v672
        %v696 = vunpack.c.l.b16 %v673
        %v697 = vunpack.c.h.b16 %v673
        %v698 = vpack.c.b16 %v684, %v682
        %v699 = vpack.c.b16 %v685, %v683
        %v700 = vpack.c.b16 %v688, %v686
        %v701 = vpack.c.b16 %v689, %v687
        %v702 = vpack.c.b16 %v692, %v690
        %v703 = vpack.c.b16 %v693, %v691
        %v704 = vpack.c.b16 %v696, %v694
        %v705 = vpack.c.b16 %v697, %v695
        %v715 = vsel %vm499, %v559, 0
        %v718 = vsel %vm499, %v560, 0
        %720 = vmatprep.subr.bf16.mxu0 %v699
        %721 = vmatpush1.bf16.msra.mxu0 %v698
        %722 = vmatprep.subr.bf16.mxu0 %v701
        %723 = vmatpush1.bf16.msra.mxu0 %v700
        %724 = vmatprep.subr.bf16.mxu0 %v703
        %725 = vmatpush1.bf16.msra.mxu0 %v702
        %726 = vmatprep.subr.bf16.mxu0 %v705
        %727 = vmatpush1.bf16.msra.mxu0 %v704
        %728 = vmatprep.subr.bf16.mxu0 0
        %729 = vmatpush1.bf16.msra.mxu0 0
        %730 = vmatprep.subr.bf16.mxu0 0
        %731 = vmatpush1.bf16.msra.mxu0 0
        %732 = vmatprep.subr.bf16.mxu0 0
        %733 = vmatpush1.bf16.msra.mxu0 0
        %734 = vmatprep.subr.bf16.mxu0 0
        %735 = vmatpush1.bf16.msra.mxu0 0
        %736 = vmatprep.subr.bf16.mxu0 0
        %737 = vmatpush1.bf16.msra.mxu0 0
        %738 = vmatprep.subr.bf16.mxu0 0
        %739 = vmatpush1.bf16.msra.mxu0 0
        %740 = vmatprep.subr.bf16.mxu0 0
        %741 = vmatpush1.bf16.msra.mxu0 0
        %742 = vmatprep.subr.bf16.mxu0 0
        %743 = vmatpush1.bf16.msra.mxu0 0
        %744 = vmatprep.subr.bf16.mxu0 0
        %745 = vmatpush1.bf16.msra.mxu0 0
        %746 = vmatprep.subr.bf16.mxu0 0
        %747 = vmatpush1.bf16.msra.mxu0 0
        %748 = vmatprep.subr.bf16.mxu0 0
        %749 = vmatpush1.bf16.msra.mxu0 0
        %750 = vmatprep.subr.bf16.mxu0 0
        %751 = vmatpush1.bf16.msra.mxu0 0
        %752 = vmatprep.mubr.bf16.mxu0 0
        %753 = vmatmul.mubr.bf16.gmra.mrb[0].mxu0 %v715
        %v754 = vpop.f32.mrb[0].mxu0
        %v755 = vadd.f32 0.0, %v754
        %v756 = vpop.f32.mrb[0].mxu0
        %v757 = vadd.f32 0.0, %v756
        %v758 = vpop.f32.mrb[0].mxu0
        %v759 = vadd.f32 0.0, %v758
        %v760 = vpop.f32.mrb[0].mxu0
        %v761 = vadd.f32 0.0, %v760
        %762 = vmatprep.mubr.bf16.mxu0 0
        %763 = vmatmul.mubr.bf16.gmra.mrb[0].mxu0 %v718
        %v764 = vpop.f32.mrb[0].mxu0
        %v765 = vadd.f32 0.0, %v764
        %v766 = vpop.f32.mrb[0].mxu0
        %v767 = vadd.f32 0.0, %v766
        %v768 = vpop.f32.mrb[0].mxu0
        %v769 = vpop.f32.mrb[0].mxu0
        %770 = vdwg.mxu0
        %v771 = vld [vmem:[%s448] sm:$0x1]
        %vm772 = vcmp.ne.s32.totalorder %v771, 0
        %v773 = vpack.c.bf16 %v663, %v660
        %v774 = vpack.c.bf16 %v759, %v755
        %v775 = vpack.c.bf16 %v765, %v765
        %v776 = vpack.c.bf16 %v761, %v757
        %v777 = vpack.c.bf16 %v767, %v767
        %v779 = vsel %vm499, %v773, 0
        %v782 = vsel %vm499, %v774, 0
        %v785 = vsel %vm499, %v775, 0
        %787 = vmatprep.subr.bf16.mxu0 0
        %788 = vmatpush1.bf16.xpose.msra.mxu0 %v782
        %789 = vmatprep.subr.bf16.mxu0 0
        %790 = vmatpush1.bf16.xpose.msra.mxu0 %v785
        %791 = vmatprep.subr.bf16.mxu0 0
        %792 = vmatpush1.bf16.xpose.msra.mxu0 0
        %793 = vmatprep.subr.bf16.mxu0 0
        %794 = vmatpush1.bf16.xpose.msra.mxu0 0
        %795 = vmatprep.subr.bf16.mxu0 0
        %796 = vmatpush1.bf16.xpose.msra.mxu0 0
        %797 = vmatprep.subr.bf16.mxu0 0
        %798 = vmatpush1.bf16.xpose.msra.mxu0 0
        %799 = vmatprep.subr.bf16.mxu0 0
        %800 = vmatpush1.bf16.xpose.msra.mxu0 0
        %801 = vmatprep.subr.bf16.mxu0 0
        %802 = vmatpush1.bf16.xpose.msra.mxu0 0
        %803 = vmatprep.subr.bf16.mxu0 0
        %804 = vmatpush1.bf16.xpose.msra.mxu0 0
        %805 = vmatprep.subr.bf16.mxu0 0
        %806 = vmatpush1.bf16.xpose.msra.mxu0 0
        %807 = vmatprep.subr.bf16.mxu0 0
        %808 = vmatpush1.bf16.xpose.msra.mxu0 0
        %809 = vmatprep.subr.bf16.mxu0 0
        %810 = vmatpush1.bf16.xpose.msra.mxu0 0
        %811 = vmatprep.subr.bf16.mxu0 0
        %812 = vmatpush1.bf16.xpose.msra.mxu0 0
        %813 = vmatprep.subr.bf16.mxu0 0
        %814 = vmatpush1.bf16.xpose.msra.mxu0 0
        %815 = vmatprep.subr.bf16.mxu0 0
        %816 = vmatpush1.bf16.xpose.msra.mxu0 0
        %817 = vmatprep.subr.bf16.mxu0 0
        %818 = vmatpush1.bf16.xpose.msra.mxu0 0
        %819 = vmatprep.mubr.bf16.mxu0 0
        %820 = vmatmul.mubr.bf16.gmra.mrb[0].mxu0 %v779
        %v821 = vpop.f32.mrb[0].mxu0
        %v822 = vadd.f32 0.0, %v821
        %v823 = vpop.f32.mrb[0].mxu0
        %v824 = vpop.f32.mrb[0].mxu0
        %v825 = vadd.f32 0.0, %v824
        %v826 = vpop.f32.mrb[0].mxu0
        %827 = vdwg.mxu0
        %v828 = vmul.f32 %v822, 0.125
        %v829 = vmul.f32 %v825, 0.125
        %v830 = vsel %vm772, 1, 0
        %v831 = vlaneseq
        %v832 = vshrl.u32 %v831, 7
        %v833 = vsub.s32 0, %v832
        %v834 = vrot.slane %v830, %v833
        %vm835 = vcmp.eq.s32.totalorder %v834, 1
        %v836 = vsel %vm835, %v828, -3.4028235e+38
        %v837 = vsel %vm835, %v829, -3.4028235e+38
        %vm838 = vcmask 195584
        %v839 = vsel %vm838, %v836, -inf
        %840 = vmax.xlane.f32.xlu0 %v839
        %v841 = vpop.xlane.xlu0 %840
        %v842 = vsel %vm838, %v837, -inf
        %843 = vmax.xlane.f32.xlu0 %v842
        %v844 = vpop.xlane.xlu0 %843
        %v845 = vsub.f32 %v836, %v841
        %v846 = vsub.f32 %v837, %v844
        %v847 = vmul.f32 %v845, 1.442695
        %v848 = vpow.pop %v847
        %v849 = vmul.f32 %v846, 1.442695
        %v850 = vpow.pop %v849
        %v851 = vsel %vm838, %v848, 0.0
        %852 = vadd.xlane.f32.xlu0 %v851
        %v853 = vpop.xlane.xlu0 %852
        %v854 = vsel %vm838, %v850, 0.0
        %855 = vadd.xlane.f32.xlu0 %v854
        %v856 = vpop.xlane.xlu0 %855
        %v857 = vrcp.pop %v853
        %v858 = vmul.f32 %v848, %v857
        %v859 = vrcp.pop %v856
        %v860 = vmul.f32 %v850, %v859
        %v861 = vpack.c.bf16 %v860, %v858
        %v863 = vsel %vm838, %v861, 0
        %vm865 = vcmask 1043456
        %v867 = vsel %vm865, %v777, 0
        %869 = vmatprep.subr.bf16.mxu0 0
        %870 = vmatpush1.bf16.msra.mxu0 %v776
        %871 = vmatprep.subr.bf16.mxu0 0
        %872 = vmatpush1.bf16.msra.mxu0 %v867
        %873 = vmatprep.subr.bf16.mxu0 0
        %874 = vmatpush1.bf16.msra.mxu0 0
        %875 = vmatprep.subr.bf16.mxu0 0
        %876 = vmatpush1.bf16.msra.mxu0 0
        %877 = vmatprep.subr.bf16.mxu0 0
        %878 = vmatpush1.bf16.msra.mxu0 0
        %879 = vmatprep.subr.bf16.mxu0 0
        %880 = vmatpush1.bf16.msra.mxu0 0
        %881 = vmatprep.subr.bf16.mxu0 0
        %882 = vmatpush1.bf16.msra.mxu0 0
        %883 = vmatprep.subr.bf16.mxu0 0
        %884 = vmatpush1.bf16.msra.mxu0 0
        %885 = vmatprep.subr.bf16.mxu0 0
        %886 = vmatpush1.bf16.msra.mxu0 0
        %887 = vmatprep.subr.bf16.mxu0 0
        %888 = vmatpush1.bf16.msra.mxu0 0
        %889 = vmatprep.subr.bf16.mxu0 0
        %890 = vmatpush1.bf16.msra.mxu0 0
        %891 = vmatprep.subr.bf16.mxu0 0
        %892 = vmatpush1.bf16.msra.mxu0 0
        %893 = vmatprep.subr.bf16.mxu0 0
        %894 = vmatpush1.bf16.msra.mxu0 0
        %895 = vmatprep.subr.bf16.mxu0 0
        %896 = vmatpush1.bf16.msra.mxu0 0
        %897 = vmatprep.subr.bf16.mxu0 0
        %898 = vmatpush1.bf16.msra.mxu0 0
        %899 = vmatprep.subr.bf16.mxu0 0
        %900 = vmatpush1.bf16.msra.mxu0 0
        %901 = vmatprep.mubr.bf16.mxu0 0
        %902 = vmatmul.mubr.bf16.gmra.mrb[0].mxu0 %v863
        %v903 = vpop.f32.mrb[0].mxu0
        %v904 = vadd.f32 0.0, %v903
        %v905 = vpop.f32.mrb[0].mxu0
        %v906 = vpop.f32.mrb[0].mxu0
        %v907 = vadd.f32 0.0, %v906
        %v908 = vpop.f32.mrb[0].mxu0
        %909 = vdwg.mxu0
        %911 = vrot.lane.b32.xlu0 %v773, 64
        %v912 = vpop.permute.xlu0 %911
        %915 = vrot.lane.b32.xlu0 %v774, 64
        %v916 = vpop.permute.xlu0 %915
        %917 = vrot.lane.b32.xlu0 %v775, 64
        %v918 = vpop.permute.xlu0 %917
        %v920 = vsel %vm499, %v912, 0
        %v923 = vsel %vm499, %v916, 0
        %v926 = vsel %vm499, %v918, 0
        %928 = vmatprep.subr.bf16.mxu0 0
        %929 = vmatpush1.bf16.xpose.msra.mxu0 %v923
        %930 = vmatprep.subr.bf16.mxu0 0
        %931 = vmatpush1.bf16.xpose.msra.mxu0 %v926
        %932 = vmatprep.subr.bf16.mxu0 0
        %933 = vmatpush1.bf16.xpose.msra.mxu0 0
        %934 = vmatprep.subr.bf16.mxu0 0
        %935 = vmatpush1.bf16.xpose.msra.mxu0 0
        %936 = vmatprep.subr.bf16.mxu0 0
        %937 = vmatpush1.bf16.xpose.msra.mxu0 0
        %938 = vmatprep.subr.bf16.mxu0 0
        %939 = vmatpush1.bf16.xpose.msra.mxu0 0
        %940 = vmatprep.subr.bf16.mxu0 0
        %941 = vmatpush1.bf16.xpose.msra.mxu0 0
        %942 = vmatprep.subr.bf16.mxu0 0
        %943 = vmatpush1.bf16.xpose.msra.mxu0 0
        %944 = vmatprep.subr.bf16.mxu0 0
        %945 = vmatpush1.bf16.xpose.msra.mxu0 0
        %946 = vmatprep.subr.bf16.mxu0 0
        %947 = vmatpush1.bf16.xpose.msra.mxu0 0
        %948 = vmatprep.subr.bf16.mxu0 0
        %949 = vmatpush1.bf16.xpose.msra.mxu0 0
        %950 = vmatprep.subr.bf16.mxu0 0
        %951 = vmatpush1.bf16.xpose.msra.mxu0 0
        %952 = vmatprep.subr.bf16.mxu0 0
        %953 = vmatpush1.bf16.xpose.msra.mxu0 0
        %954 = vmatprep.subr.bf16.mxu0 0
        %955 = vmatpush1.bf16.xpose.msra.mxu0 0
        %956 = vmatprep.subr.bf16.mxu0 0
        %957 = vmatpush1.bf16.xpose.msra.mxu0 0
        %958 = vmatprep.subr.bf16.mxu0 0
        %959 = vmatpush1.bf16.xpose.msra.mxu0 0
        %960 = vmatprep.mubr.bf16.mxu0 0
        %961 = vmatmul.mubr.bf16.gmra.mrb[0].mxu0 %v920
        %v962 = vpop.f32.mrb[0].mxu0
        %v963 = vadd.f32 0.0, %v962
        %v964 = vpop.f32.mrb[0].mxu0
        %v965 = vpop.f32.mrb[0].mxu0
        %v966 = vadd.f32 0.0, %v965
        %v967 = vpop.f32.mrb[0].mxu0
        %968 = vdwg.mxu0
        %v969 = vmul.f32 %v963, 0.125
        %v970 = vmul.f32 %v966, 0.125
        %v971 = vsel %vm835, %v969, -3.4028235e+38
        %v972 = vsel %vm835, %v970, -3.4028235e+38
        %v973 = vsel %vm838, %v971, -inf
        %974 = vmax.xlane.f32.xlu0 %v973
        %v975 = vpop.xlane.xlu0 %974
        %v976 = vsel %vm838, %v972, -inf
        %977 = vmax.xlane.f32.xlu0 %v976
        %v978 = vpop.xlane.xlu0 %977
        %v979 = vsub.f32 %v971, %v975
        %v980 = vsub.f32 %v972, %v978
        %v981 = vmul.f32 %v979, 1.442695
        %v982 = vpow.pop %v981
        %v983 = vmul.f32 %v980, 1.442695
        %v984 = vpow.pop %v983
        %v985 = vsel %vm838, %v982, 0.0
        %986 = vadd.xlane.f32.xlu0 %v985
        %v987 = vpop.xlane.xlu0 %986
        %v988 = vsel %vm838, %v984, 0.0
        %989 = vadd.xlane.f32.xlu0 %v988
        %v990 = vpop.xlane.xlu0 %989
        %v991 = vrcp.pop %v987
        %v992 = vmul.f32 %v982, %v991
        %v993 = vrcp.pop %v990
        %v994 = vmul.f32 %v984, %v993
        %v995 = vpack.c.bf16 %v994, %v992
        %998 = vrot.lane.b32.xlu0 %v776, 64
        %v999 = vpop.permute.xlu0 %998
        %1000 = vrot.lane.b32.xlu0 %v777, 64
        %v1001 = vpop.permute.xlu0 %1000
        %v1004 = vsel %vm838, %v995, 0
        %v1007 = vsel %vm865, %v1001, 0
        %1009 = vmatprep.subr.bf16.mxu0 0
        %1010 = vmatpush1.bf16.msra.mxu0 %v999
        %1011 = vmatprep.subr.bf16.mxu0 0
        %1012 = vmatpush1.bf16.msra.mxu0 %v1007
        %1013 = vmatprep.subr.bf16.mxu0 0
        %1014 = vmatpush1.bf16.msra.mxu0 0
        %1015 = vmatprep.subr.bf16.mxu0 0
        %1016 = vmatpush1.bf16.msra.mxu0 0
        %1017 = vmatprep.subr.bf16.mxu0 0
        %1018 = vmatpush1.bf16.msra.mxu0 0
        %1019 = vmatprep.subr.bf16.mxu0 0
        %1020 = vmatpush1.bf16.msra.mxu0 0
        %1021 = vmatprep.subr.bf16.mxu0 0
        %1022 = vmatpush1.bf16.msra.mxu0 0
        %1023 = vmatprep.subr.bf16.mxu0 0
        %1024 = vmatpush1.bf16.msra.mxu0 0
        %1025 = vmatprep.subr.bf16.mxu0 0
        %1026 = vmatpush1.bf16.msra.mxu0 0
        %1027 = vmatprep.subr.bf16.mxu0 0
        %1028 = vmatpush1.bf16.msra.mxu0 0
        %1029 = vmatprep.subr.bf16.mxu0 0
        %1030 = vmatpush1.bf16.msra.mxu0 0
        %1031 = vmatprep.subr.bf16.mxu0 0
        %1032 = vmatpush1.bf16.msra.mxu0 0
        %1033 = vmatprep.subr.bf16.mxu0 0
        %1034 = vmatpush1.bf16.msra.mxu0 0
        %1035 = vmatprep.subr.bf16.mxu0 0
        %1036 = vmatpush1.bf16.msra.mxu0 0
        %1037 = vmatprep.subr.bf16.mxu0 0
        %1038 = vmatpush1.bf16.msra.mxu0 0
        %1039 = vmatprep.subr.bf16.mxu0 0
        %1040 = vmatpush1.bf16.msra.mxu0 0
        %1041 = vmatprep.mubr.bf16.mxu0 0
        %1042 = vmatmul.mubr.bf16.gmra.mrb[0].mxu0 %v1004
        %v1043 = vpop.f32.mrb[0].mxu0
        %v1044 = vadd.f32 0.0, %v1043
        %v1045 = vpop.f32.mrb[0].mxu0
        %v1046 = vpop.f32.mrb[0].mxu0
        %v1047 = vadd.f32 0.0, %v1046
        %v1048 = vpop.f32.mrb[0].mxu0
        %1049 = vdwg.mxu0
        %1052 = vrot.lane.b32.xlu0 %v1044, 64
        %v1053 = vpop.permute.xlu0 %1052
        %1054 = vrot.lane.b32.xlu0 %v1047, 64
        %v1055 = vpop.permute.xlu0 %1054
        %v1058 = vsel %vm499, %v904, %v1053
        %v1059 = vsel %vm499, %v907, %v1055
        %v1060 = vpack.c.bf16 %v1059, %v1058
        %v1061 = vld [vmem:[%s9] sm:$0xf]
        %v1062 = vld [vmem:[%s9 + $0x4] sm:$0xf]
        %v1063 = vld [vmem:[%s9 + $0x8] sm:$0xf]
        %v1064 = vld [vmem:[%s9 + $0xc] sm:$0xf]
        %v1065 = vld [vmem:[%s9 + $0x10] sm:$0xf]
        %v1066 = vld [vmem:[%s9 + $0x14] sm:$0xf]
        %v1067 = vld [vmem:[%s9 + $0x18] sm:$0xf]
        %v1068 = vld [vmem:[%s9 + $0x1c] sm:$0xf]
        %v1069 = vld [vmem:[%s9 + $0x20] sm:$0xf]
        %v1070 = vld [vmem:[%s9 + $0x24] sm:$0xf]
        %v1071 = vld [vmem:[%s9 + $0x28] sm:$0xf]
        %v1072 = vld [vmem:[%s9 + $0x2c] sm:$0xf]
        %v1073 = vld [vmem:[%s9 + $0x30] sm:$0xf]
        %v1074 = vld [vmem:[%s9 + $0x34] sm:$0xf]
        %v1075 = vld [vmem:[%s9 + $0x38] sm:$0xf]
        %v1076 = vld [vmem:[%s9 + $0x3c] sm:$0xf]
        %v1077 = vld [vmem:[%s10] sm:$0x1]
        %v1079 = vlaneseq
        %v1080 = vshrl.u32 %v1079, 7
        %v1081 = vsub.s32 0, %v1080
        %v1082 = vrot.slane %v1077, %v1081
        %v1100 = vunpack.c.l.b16 %v1061
        %v1101 = vunpack.c.l.b16 %v1062
        %v1102 = vunpack.c.l.b16 %v1063
        %v1103 = vunpack.c.l.b16 %v1064
        %v1104 = vunpack.c.l.b16 %v1065
        %v1105 = vunpack.c.l.b16 %v1066
        %v1106 = vunpack.c.l.b16 %v1067
        %v1107 = vunpack.c.l.b16 %v1068
        %v1108 = vunpack.c.l.b16 %v1069
        %v1109 = vunpack.c.l.b16 %v1070
        %v1110 = vunpack.c.l.b16 %v1071
        %v1111 = vunpack.c.l.b16 %v1072
        %v1112 = vunpack.c.l.b16 %v1073
        %v1113 = vunpack.c.l.b16 %v1074
        %v1114 = vunpack.c.l.b16 %v1075
        %v1115 = vunpack.c.l.b16 %v1076
        %v1116 = vpack.c.b16 %v1101, %v1100
        %v1117 = vpack.c.b16 %v1103, %v1102
        %v1118 = vpack.c.b16 %v1105, %v1104
        %v1119 = vpack.c.b16 %v1107, %v1106
        %v1120 = vpack.c.b16 %v1109, %v1108
        %v1121 = vpack.c.b16 %v1111, %v1110
        %v1122 = vpack.c.b16 %v1113, %v1112
        %v1123 = vpack.c.b16 %v1115, %v1114
        %1132 = vmatprep.subr.bf16.mxu0 0
        %1133 = vmatpush1.bf16.msra.mxu0 %v1116
        %1134 = vmatprep.subr.bf16.mxu0 0
        %1135 = vmatpush1.bf16.msra.mxu0 %v1117
        %1136 = vmatprep.subr.bf16.mxu0 0
        %1137 = vmatpush1.bf16.msra.mxu0 %v1118
        %1138 = vmatprep.subr.bf16.mxu0 0
        %1139 = vmatpush1.bf16.msra.mxu0 %v1119
        %1140 = vmatprep.subr.bf16.mxu0 0
        %1141 = vmatpush1.bf16.msra.mxu0 %v1120
        %1142 = vmatprep.subr.bf16.mxu0 0
        %1143 = vmatpush1.bf16.msra.mxu0 %v1121
        %1144 = vmatprep.subr.bf16.mxu0 0
        %1145 = vmatpush1.bf16.msra.mxu0 %v1122
        %1146 = vmatprep.subr.bf16.mxu0 0
        %1147 = vmatpush1.bf16.msra.mxu0 %v1123
        %1148 = vmatprep.subr.bf16.mxu0 0
        %1149 = vmatpush1.bf16.msra.mxu0 0
        %1150 = vmatprep.subr.bf16.mxu0 0
        %1151 = vmatpush1.bf16.msra.mxu0 0
        %1152 = vmatprep.subr.bf16.mxu0 0
        %1153 = vmatpush1.bf16.msra.mxu0 0
        %1154 = vmatprep.subr.bf16.mxu0 0
        %1155 = vmatpush1.bf16.msra.mxu0 0
        %1156 = vmatprep.subr.bf16.mxu0 0
        %1157 = vmatpush1.bf16.msra.mxu0 0
        %1158 = vmatprep.subr.bf16.mxu0 0
        %1159 = vmatpush1.bf16.msra.mxu0 0
        %1160 = vmatprep.subr.bf16.mxu0 0
        %1161 = vmatpush1.bf16.msra.mxu0 0
        %1162 = vmatprep.subr.bf16.mxu0 0
        %1163 = vmatpush1.bf16.msra.mxu0 0
        %1164 = vmatprep.mubr.bf16.mxu0 0
        %1165 = vmatmul.mubr.bf16.gmra.mrb[0].mxu0 %v1060
        %v1166 = vpop.f32.mrb[0].mxu0
        %v1167 = vadd.f32 %v1082, %v1166
        %v1168 = vpop.f32.mrb[0].mxu0
        %v1169 = vpop.f32.mrb[0].mxu0
        %v1170 = vadd.f32 %v1082, %v1169
        %v1171 = vpop.f32.mrb[0].mxu0
        %1172 = vdwg.mxu0
        %1173 = vst [vmem:[%s430] sm:$0xff] %v1167
        %1174 = vst [vmem:[%s430 + $0x8] sm:$0xff] %v1170
        %s1175 = sand.u32 %s295, 1
        %s1176 = scalar_lea.sflag [#allocation3], %s1175
        %s1177 = sand.u32 %s295, 1
        %s1178 = smul.addr %s1177, 16
        %s1179 = scalar_lea.vmem [#allocation2], %s1178
        // Predicated region
        $region65: #{prenorm_cross_attention.1} parent=63 // pred_check
          %p1180 = pneg %p305
        $region66: #{prenorm_cross_attention.1} parent=63 // pred_check_branch
          %1182 = sbr.rel (%p1180) target = $region68
        $region67: #{prenorm_cross_attention.1} parent=63 // pred_region
          %s1183 = smul.u32 2, %s30
          %s1185 = ssub.s32 256, 256
          %1186 = vsyncadd %s1176, %s1185
          %s1187 = smul.addr %s29, 2
          %s1188 = sadd.s32 %s1183, %s1187
          %s1189 = smul.addr %s1188, 128
          %s1190 = scalar_lea.hbm %s11, %s1189
          %s1191 = sshll.u32 %s1179, 4
          %s1192 = int_to_ptr.vmem [resolvable:$true] %s1191
          %1197 = dma.vmem_to_hbm [thread:$0]  %s1192, 256, %s1190, %s1176, 128, 128, 8
        $region68: #{prenorm_cross_attention.1} parent=63 // pred_fallthru
          _
      $region64: #{prenorm_cross_attention.1} parent=5 // pred_fallthru
        _
      %p1198 = scmp.le.s32.totalorder 2, %s20
      // Predicated region
      $region69: #{prenorm_cross_attention.1} parent=5 // pred_check
        %p1199 = pneg %p1198
      $region70: #{prenorm_cross_attention.1} parent=5 // pred_check_branch
        %1201 = sbr.rel (%p1199) target = $region72
      $region71: #{prenorm_cross_attention.1} parent=5 // pred_region
        %s1202 = ssub.s32 %s20, 2
        // Predicated region
        $region73: #{prenorm_cross_attention.1} parent=71 // pred_check
          %p1203 = pneg %p311
        $region74: #{prenorm_cross_attention.1} parent=71 // pred_check_branch
          %1205 = sbr.rel (%p1203) target = $region76
        $region75: #{prenorm_cross_attention.1} parent=71 // pred_region
          %s1206 = sand.u32 %s296, 1
          %s1207 = scalar_lea.sflag [#allocation3], %s1206
          %s1208 = sand.u32 %s296, 1
          %s1209 = smul.addr %s1208, 16
          %s1210 = scalar_lea.vmem [#allocation2], %s1209
          %1211 = dma.done %s1207, 256
        $region76: #{prenorm_cross_attention.1} parent=71 // pred_fallthru
          _
      $region72: #{prenorm_cross_attention.1} parent=5 // pred_fallthru
        _
    $region6: #{prenorm_cross_attention.1} parent=1 // loop_footer
      %s24 = sadd.s32 1, %s20
    $region7: #{prenorm_cross_attention.1} parent=1 // loop_footer_branch
      %19 = sbr.rel target = $region3
    $region8: #{prenorm_cross_attention.1} parent=1 // loop_exit
      _
    %1212 = vsyncpa [#allocation3], 1
    %s1213 = scalar_lea.sflag [#allocation3], 1
    %1214 = vsyncpa %s1213, 1

</llo_original>
